<compile_context>
chip_gen: v6e
topology: v6e:2x2x1
jax: 0.10.0
libtpu: 0.0.40
codegen_flags: <defaults>
</compile_context>

<pallas_src>
import functools

import jax
import jax.numpy as jnp
from jax.experimental import pallas as pl
from jax.experimental.pallas import tpu as pltpu

LANE = 128                      # lane width: all *stored* channel dims pad to this
SUBLANE = 16                    # bf16 sublane multiple: K dims / row tiles pad to this
MAX_TM = 1024                   # row-tile cap (bf16 operands + de-padded K keep tiles small)
VMEM_LIMIT = 48 * 1024 * 1024   # > v5e/v6e scoped defaults, conservative for v7x (64 MiB)


def _round_up(x, m):
    return (x + m - 1) // m * m


def _row_tile(m):
    """Row tile: multiple of 16, capped at MAX_TM, and sized so the grid has
    >= 2 steps whenever m allows it (v7x megacore row sharding)."""
    half = _round_up(max((m + 1) // 2, SUBLANE), SUBLANE)
    return min(MAX_TM, half)


# ----------------------------- Pallas kernels ------------------------------ #

def _matmul_bias_act_kernel(x_ref, w_ref, b_ref, o_ref, *, relu):
    """o = x @ w + b (bf16 operands, f32 MXU accumulation), optional ReLU."""
    acc = jnp.dot(x_ref[...], w_ref[...], preferred_element_type=jnp.float32)
    acc = acc + b_ref[...]                       # (1, N) f32 broadcast over rows
    if relu:
        acc = jnp.maximum(acc, 0.0)
    o_ref[...] = acc.astype(o_ref.dtype)


def _head_kernel(xp_ref, wup_ref, bup_ref, wfin_ref, bfin_ref, o_ref, *,
                 n_par, kp, cpad):
    """Fused head: 4 per-parity deconv matmuls (+bias+ReLU) and ONE 1x1 predictor.

    xp_ref : [TM, n_par*kp]   bf16 per-parity im2col patches (parity-major K)
    wup_ref: [n_par*kp, cpad] bf16 per-parity 2x2 sub-kernels (parity-major rows)
    wfin   : [cpad, cpad]     f32 1x1 predictor (keypoints in first lanes)
    o_ref  : [TM, n_par*cpad] f32 parity-major heatmap blocks (lane-dense)
    """
    tm = xp_ref.shape[0]
    bup = bup_ref[...]
    ups = []
    for p in range(n_par):                       # static unroll (4 parities)
        x_p = xp_ref[:, p * kp:(p + 1) * kp]
        w_p = wup_ref[p * kp:(p + 1) * kp, :]
        up = jnp.dot(x_p, w_p, preferred_element_type=jnp.float32) + bup
        ups.append(jnp.maximum(up, 0.0))         # deconv ReLU, stays in VMEM (f32)
    # One long-LHS 1x1 predictor matmul keeps wfin resident in the MXU.  It is
    # kept f32 end-to-end so the deconv accumulator is never rounded to bf16.
    up_all = jnp.concatenate(ups, axis=0)        # [n_par*TM, cpad] f32
    hm = jnp.dot(up_all, wfin_ref[...], preferred_element_type=jnp.float32)
    hm = hm + bfin_ref[...]
    for p in range(n_par):
        o_ref[:, p * cpad:(p + 1) * cpad] = hm[p * tm:(p + 1) * tm, :].astype(o_ref.dtype)


# --------------------------- pallas_call wrappers --------------------------- #

def fused_matmul_bias(x, w, b, *, relu, out_dtype):
    """x: [M, K] bf16, w: [K, N] bf16, b: [N] f32 -> [M, N]; N % 128 == 0."""
    M, K = x.shape
    K2, N = w.shape
    assert K == K2 and N % LANE == 0, (K, K2, N)
    TM = _row_tile(M)
    Mp = _round_up(M, TM)
    if Mp != M:
        x = jnp.pad(x, ((0, Mp - M), (0, 0)))
    out = pl.pallas_call(
        functools.partial(_matmul_bias_act_kernel, relu=relu),
        out_shape=jax.ShapeDtypeStruct((Mp, N), out_dtype),
        grid=(Mp // TM,),
        in_specs=[
            pl.BlockSpec((TM, K), lambda i: (i, 0)),
            pl.BlockSpec((K, N), lambda i: (0, 0)),
            pl.BlockSpec((1, N), lambda i: (0, 0)),
        ],
        out_specs=pl.BlockSpec((TM, N), lambda i: (i, 0)),
        compiler_params=pltpu.CompilerParams(
            dimension_semantics=("parallel",),
            vmem_limit_bytes=VMEM_LIMIT,
        ),
    )(x, w, b.reshape(1, N))
    return out[:M] if Mp != M else out


def fused_head(xp, w_up, b_up, w_fin, b_fin, *, n_par=4):
    """Fused deconv(+ReLU)+1x1 head. xp: [M, n_par*kp] bf16 -> [M, n_par*128] f32."""
    M, Kall = xp.shape
    assert Kall % n_par == 0
    kp = Kall // n_par
    cpad = w_fin.shape[1]
    TM = _row_tile(M)
    Mp = _round_up(M, TM)
    if Mp != M:
        xp = jnp.pad(xp, ((0, Mp - M), (0, 0)))
    kernel = functools.partial(_head_kernel, n_par=n_par, kp=kp, cpad=cpad)
    out = pl.pallas_call(
        kernel,
        out_shape=jax.ShapeDtypeStruct((Mp, n_par * cpad), jnp.float32),
        grid=(Mp // TM,),
        in_specs=[
            pl.BlockSpec((TM, Kall), lambda i: (i, 0)),
            pl.BlockSpec((Kall, cpad), lambda i: (0, 0)),
            pl.BlockSpec((1, cpad), lambda i: (0, 0)),
            pl.BlockSpec((cpad, cpad), lambda i: (0, 0)),
            pl.BlockSpec((1, cpad), lambda i: (0, 0)),
        ],
        out_specs=pl.BlockSpec((TM, n_par * cpad), lambda i: (i, 0)),
        compiler_params=pltpu.CompilerParams(
            dimension_semantics=("parallel",),
            vmem_limit_bytes=VMEM_LIMIT,
        ),
    )(xp, w_up, b_up.reshape(1, cpad), w_fin, b_fin.reshape(1, cpad))
    return out[:M] if Mp != M else out


# ------------------------- conv helpers (im2col glue) ----------------------- #

def _im2col(x_nhwc, ksize, stride, pad):
    """Column order = (kh, kw, c), matching the weight-matrix row order."""
    N, H, W, C = x_nhwc.shape
    xp = jnp.pad(x_nhwc, ((0, 0), (pad, pad), (pad, pad), (0, 0)))
    OH = (H + 2 * pad - ksize) // stride + 1
    OW = (W + 2 * pad - ksize) // stride + 1
    cols = []
    for i in range(ksize):
        for j in range(ksize):
            cols.append(xp[:, i:i + stride * OH:stride,
                           j:j + stride * OW:stride, :])
    patches = jnp.concatenate(cols, axis=-1).reshape(N * OH * OW,
                                                     ksize * ksize * C)
    return patches, OH, OW


def conv2d_padded(x_nhwc, w_mat, b, *, ksize, stride, pad, relu, out_dtype):
    """Conv via im2col + fused Pallas matmul. w_mat: [K_pad, 128] bf16 (real K rows)."""
    N = x_nhwc.shape[0]
    patches, OH, OW = _im2col(x_nhwc, ksize, stride, pad)
    K = patches.shape[1]
    Kp = w_mat.shape[0]
    if Kp != K:
        patches = jnp.pad(patches, ((0, 0), (0, Kp - K)))
    patches = patches.astype(jnp.bfloat16)
    out = fused_matmul_bias(patches, w_mat, b, relu=relu, out_dtype=out_dtype)
    return out.reshape(N, OH, OW, w_mat.shape[1])


# -------------------------------- the model --------------------------------- #

class MMPoseModelPallas:
    def __init__(self, key, in_channels=3, num_keypoints=17):
        widths = (16, 32, 32)       # backbone channel widths (real)
        deconv_ch = 32
        self.num_keypoints = num_keypoints
        keys = jax.random.split(key, 6)

        def winit(k, shape, fan_in):
            return (jax.random.normal(k, shape, jnp.float32)
                    * (1.0 / jnp.sqrt(jnp.float32(fan_in))))

        # backbone: 3x conv3x3 s2 p1.  Weights stored as bf16 [K_real->pad16, 128]
        # matrices (de-padded reduction dim, lane-dense output dim).
        self.backbone = []
        cin = in_channels
        for idx, cout in enumerate(widths):
            w_real = winit(keys[idx], (3, 3, cin, cout), 9 * cin)
            K = 3 * 3 * cin
            Kp = _round_up(K, SUBLANE)
            w_mat = jnp.zeros((Kp, LANE), jnp.float32)
            w_mat = w_mat.at[:K, :cout].set(w_real.reshape(K, cout))
            b = jnp.zeros((LANE,), jnp.float32)
            self.backbone.append((w_mat.astype(jnp.bfloat16), b, cout))
            cin = cout

        # neck: None (matches the hasattr(tmp, 'neck') == False branch)
        self.neck = None

        # head: ConvTranspose2d(4, s=2, p=1) + ReLU, then 1x1 conv.
        # The transposed conv is parameterized directly as its exact per-parity
        # decomposition: 4 sub-kernels W[py,px,ty,tx,cin,cd] (synthetic init,
        # equivalent to a ConvTranspose2d weight up to a fixed re-indexing).
        cd = deconv_ch
        cin_real = cin                                          # 32
        w_up_real = winit(keys[3], (2, 2, 2, 2, cin_real, cd), 16 * cin_real)
        kp = 4 * cin_real                                       # 128 (real K per parity)
        w_up_mat = w_up_real.reshape(4 * kp, cd)                # parity-major, (ty,tx,cin) inner
        self.w_up = (jnp.zeros((4 * kp, LANE), jnp.float32)
                     .at[:, :cd].set(w_up_mat)).astype(jnp.bfloat16)
        self.b_up = jnp.zeros((LANE,), jnp.float32)

        w_fin_real = winit(keys[4], (cd, num_keypoints), cd)
        self.w_fin = (jnp.zeros((LANE, LANE), jnp.float32)      # kept f32 (precision)
                      .at[:cd, :num_keypoints].set(w_fin_real))
        self.b_fin = jnp.zeros((LANE,), jnp.float32)

        self._heatmaps_scale = 0.25

    def __call__(self, x_nchw):
        x = jnp.transpose(x_nchw, (0, 2, 3, 1))          # NCHW -> NHWC
        # ---- backbone: 3x (conv3x3 s2 p1 + ReLU), 8x downsample ----
        for (w_mat, b, cout) in self.backbone:
            x = conv2d_padded(x, w_mat, b, ksize=3, stride=2, pad=1,
                              relu=True, out_dtype=jnp.bfloat16)
            x = x[..., :cout]        # drop lane padding before next layer's patches
        # ---- neck: absent ----
        if self.neck is not None:
            pass
        # ---- head: fused deconv (sub-pixel decomposition) + ReLU + 1x1 ----
        N, H, W, C = x.shape                               # C = real 32 channels
        xpad = jnp.pad(x, ((0, 0), (1, 1), (1, 1), (0, 0)))
        par_patches = []
        for py in range(2):
            for px in range(2):
                cols = []
                for ty in range(2):
                    for tx in range(2):
                        cols.append(xpad[:, py + ty:py + ty + H,
                                         px + tx:px + tx + W, :])
                par_patches.append(
                    jnp.concatenate(cols, axis=-1).reshape(N * H * W, 4 * C))
        xp = jnp.concatenate(par_patches, axis=-1).astype(jnp.bfloat16)   # [M, 16*C]
        hm = fused_head(xp, self.w_up, self.b_up, self.w_fin, self.b_fin)
        # pixel-shuffle the parity blocks: [N*H*W, 4*128] -> [N, 2H, 2W, 128]
        hm = hm.reshape(N, H, W, 2, 2, LANE)
        hm = jnp.transpose(hm, (0, 1, 3, 2, 4, 5)).reshape(N, 2 * H, 2 * W, LANE)
        hm = hm[..., :self.num_keypoints]                 # drop lane padding
        return {
            'heatmaps': jnp.transpose(hm, (0, 3, 1, 2)),  # back to NCHW
            'heatmaps_scale': self._heatmaps_scale,
        }


# ----------------------------------- main ----------------------------------- #

if __name__ == "__main__":
    key = jax.random.PRNGKey(0)
    k_in, k_params = jax.random.split(key)

    B, C, H, W = 2, 3, 16, 16
    x = jax.random.normal(k_in, (B, C, H, W), jnp.float32)

    model = MMPoseModelPallas(k_params, in_channels=C, num_keypoints=17)
    fwd = jax.jit(model.__call__)
    out = fwd(x)
    heatmaps = jax.block_until_ready(out['heatmaps'])

    assert heatmaps.shape == (B, 17, H // 4, W // 4), heatmaps.shape
    assert heatmaps.dtype == jnp.float32
    assert float(out['heatmaps_scale']) == 0.25
    assert bool(jnp.all(jnp.isfinite(heatmaps)))

    print("KERNEL_OK")
</pallas_src>

<mosaic_0001>
module attributes {stable_mosaic.version = 11 : i64} {
  func.func @_matmul_bias_act_kernel(%arg0: i32, %arg1: memref<64x32xbf16, #tpu.memory_space<vmem>>, %arg2: memref<32x128xbf16, #tpu.memory_space<vmem>>, %arg3: memref<1x128xf32, #tpu.memory_space<vmem>>, %arg4: memref<64x128xbf16, #tpu.memory_space<vmem>>) attributes {dimension_semantics = [#tpu.dimension_semantics<parallel>], iteration_bounds = array<i64: 2>, scalar_prefetch = 0 : i64, scratch_operands = 0 : i64, tpu.core_type = #tpu.core_type<tc>, window_params = [{transform_indices = @transform_0, window_bounds = array<i64: 64, 32>}, {pipeline_mode = #tpu.pipeline_mode<synchronous>, transform_indices = @transform_1, window_bounds = array<i64: 32, 128>}, {pipeline_mode = #tpu.pipeline_mode<synchronous>, transform_indices = @transform_2, window_bounds = array<i64: 1, 128>}, {transform_indices = @transform_3, window_bounds = array<i64: 64, 128>}]} {
    %c0 = arith.constant 0 : index
    %c0_0 = arith.constant 0 : index
    %0 = vector.load %arg1[%c0, %c0_0] : memref<64x32xbf16, #tpu.memory_space<vmem>>, vector<64x32xbf16>
    %c0_1 = arith.constant 0 : index
    %c0_2 = arith.constant 0 : index
    %1 = vector.load %arg2[%c0_1, %c0_2] : memref<32x128xbf16, #tpu.memory_space<vmem>>, vector<32x128xbf16>
    %cst = arith.constant dense<0.000000e+00> : vector<64x128xf32>
    %2 = tpu.matmul %0, %1, %cst {dimension_numbers = #tpu.dot_dimension_numbers<[1], [0], [0], [1], [0, 0, 1, 1], [], []>} : vector<64x32xbf16>, vector<32x128xbf16>, vector<64x128xf32> -> vector<64x128xf32>
    %c0_3 = arith.constant 0 : index
    %c0_4 = arith.constant 0 : index
    %3 = vector.load %arg3[%c0_3, %c0_4] : memref<1x128xf32, #tpu.memory_space<vmem>>, vector<1x128xf32>
    %4 = vector.broadcast %3 : vector<1x128xf32> to vector<64x128xf32>
    %5 = arith.addf %2, %4 : vector<64x128xf32>
    %cst_5 = arith.constant 0.000000e+00 : f32
    %6 = vector.broadcast %cst_5 : f32 to vector<64x128xf32>
    %7 = arith.maximumf %5, %6 : vector<64x128xf32>
    %8 = arith.truncf %7 : vector<64x128xf32> to vector<64x128xbf16>
    %c0_6 = arith.constant 0 : index
    %c0_7 = arith.constant 0 : index
    %9 = vector.load %arg4[%c0_6, %c0_7] : memref<64x128xbf16, #tpu.memory_space<vmem>>, vector<64x128xbf16>
    tpu.vector_store %arg4[%c0_6, %c0_7], %8 {strides = array<i32>} : memref<64x128xbf16, #tpu.memory_space<vmem>>, vector<64x128xbf16>,
    return
  }
  func.func @transform_0(%arg0: i32) -> (i32, i32) {
    %c0_i32 = arith.constant 0 : i32
    %c0_i32_0 = arith.constant 0 : i32
    return %arg0, %c0_i32 : i32, i32
  }
  func.func @transform_1(%arg0: i32) -> (i32, i32) {
    %c0_i32 = arith.constant 0 : i32
    %c0_i32_0 = arith.constant 0 : i32
    %c0_i32_1 = arith.constant 0 : i32
    return %c0_i32, %c0_i32_0 : i32, i32
  }
  func.func @transform_2(%arg0: i32) -> (i32, i32) {
    %c0_i32 = arith.constant 0 : i32
    %c0_i32_0 = arith.constant 0 : i32
    %c0_i32_1 = arith.constant 0 : i32
    return %c0_i32, %c0_i32_0 : i32, i32
  }
  func.func @transform_3(%arg0: i32) -> (i32, i32) {
    %c0_i32 = arith.constant 0 : i32
    %c0_i32_0 = arith.constant 0 : i32
    return %arg0, %c0_i32 : i32, i32
  }
}

module attributes {stable_mosaic.version = 11 : i64} {
  func.func @_matmul_bias_act_kernel(%arg0: i32, %arg1: memref<16x144xbf16, #tpu.memory_space<vmem>>, %arg2: memref<144x128xbf16, #tpu.memory_space<vmem>>, %arg3: memref<1x128xf32, #tpu.memory_space<vmem>>, %arg4: memref<16x128xbf16, #tpu.memory_space<vmem>>) attributes {dimension_semantics = [#tpu.dimension_semantics<parallel>], iteration_bounds = array<i64: 2>, scalar_prefetch = 0 : i64, scratch_operands = 0 : i64, tpu.core_type = #tpu.core_type<tc>, window_params = [{transform_indices = @transform_0, window_bounds = array<i64: 16, 144>}, {pipeline_mode = #tpu.pipeline_mode<synchronous>, transform_indices = @transform_1, window_bounds = array<i64: 144, 128>}, {pipeline_mode = #tpu.pipeline_mode<synchronous>, transform_indices = @transform_2, window_bounds = array<i64: 1, 128>}, {transform_indices = @transform_3, window_bounds = array<i64: 16, 128>}]} {
    %c0 = arith.constant 0 : index
    %c0_0 = arith.constant 0 : index
    %0 = vector.load %arg1[%c0, %c0_0] : memref<16x144xbf16, #tpu.memory_space<vmem>>, vector<16x144xbf16>
    %c0_1 = arith.constant 0 : index
    %c0_2 = arith.constant 0 : index
    %1 = vector.load %arg2[%c0_1, %c0_2] : memref<144x128xbf16, #tpu.memory_space<vmem>>, vector<144x128xbf16>
    %cst = arith.constant dense<0.000000e+00> : vector<16x128xf32>
    %2 = tpu.matmul %0, %1, %cst {dimension_numbers = #tpu.dot_dimension_numbers<[1], [0], [0], [1], [0, 0, 1, 1], [], []>} : vector<16x144xbf16>, vector<144x128xbf16>, vector<16x128xf32> -> vector<16x128xf32>
    %c0_3 = arith.constant 0 : index
    %c0_4 = arith.constant 0 : index
    %3 = vector.load %arg3[%c0_3, %c0_4] : memref<1x128xf32, #tpu.memory_space<vmem>>, vector<1x128xf32>
    %4 = vector.broadcast %3 : vector<1x128xf32> to vector<16x128xf32>
    %5 = arith.addf %2, %4 : vector<16x128xf32>
    %cst_5 = arith.constant 0.000000e+00 : f32
    %6 = vector.broadcast %cst_5 : f32 to vector<16x128xf32>
    %7 = arith.maximumf %5, %6 : vector<16x128xf32>
    %8 = arith.truncf %7 : vector<16x128xf32> to vector<16x128xbf16>
    %c0_6 = arith.constant 0 : index
    %c0_7 = arith.constant 0 : index
    %9 = vector.load %arg4[%c0_6, %c0_7] : memref<16x128xbf16, #tpu.memory_space<vmem>>, vector<16x128xbf16>
    tpu.vector_store %arg4[%c0_6, %c0_7], %8 {strides = array<i32>} : memref<16x128xbf16, #tpu.memory_space<vmem>>, vector<16x128xbf16>,
    return
  }
  func.func @transform_0(%arg0: i32) -> (i32, i32) {
    %c0_i32 = arith.constant 0 : i32
    %c0_i32_0 = arith.constant 0 : i32
    return %arg0, %c0_i32 : i32, i32
  }
  func.func @transform_1(%arg0: i32) -> (i32, i32) {
    %c0_i32 = arith.constant 0 : i32
    %c0_i32_0 = arith.constant 0 : i32
    %c0_i32_1 = arith.constant 0 : i32
    return %c0_i32, %c0_i32_0 : i32, i32
  }
  func.func @transform_2(%arg0: i32) -> (i32, i32) {
    %c0_i32 = arith.constant 0 : i32
    %c0_i32_0 = arith.constant 0 : i32
    %c0_i32_1 = arith.constant 0 : i32
    return %c0_i32, %c0_i32_0 : i32, i32
  }
  func.func @transform_3(%arg0: i32) -> (i32, i32) {
    %c0_i32 = arith.constant 0 : i32
    %c0_i32_0 = arith.constant 0 : i32
    return %arg0, %c0_i32 : i32, i32
  }
}

module attributes {stable_mosaic.version = 11 : i64} {
  func.func @_matmul_bias_act_kernel(%arg0: i32, %arg1: memref<16x288xbf16, #tpu.memory_space<vmem>>, %arg2: memref<288x128xbf16, #tpu.memory_space<vmem>>, %arg3: memref<1x128xf32, #tpu.memory_space<vmem>>, %arg4: memref<16x128xbf16, #tpu.memory_space<vmem>>) attributes {dimension_semantics = [#tpu.dimension_semantics<parallel>], iteration_bounds = array<i64: 1>, scalar_prefetch = 0 : i64, scratch_operands = 0 : i64, tpu.core_type = #tpu.core_type<tc>, window_params = [{transform_indices = @transform_0, window_bounds = array<i64: 16, 288>}, {pipeline_mode = #tpu.pipeline_mode<synchronous>, transform_indices = @transform_1, window_bounds = array<i64: 288, 128>}, {pipeline_mode = #tpu.pipeline_mode<synchronous>, transform_indices = @transform_2, window_bounds = array<i64: 1, 128>}, {transform_indices = @transform_3, window_bounds = array<i64: 16, 128>}]} {
    %c0 = arith.constant 0 : index
    %c0_0 = arith.constant 0 : index
    %0 = vector.load %arg1[%c0, %c0_0] : memref<16x288xbf16, #tpu.memory_space<vmem>>, vector<16x288xbf16>
    %c0_1 = arith.constant 0 : index
    %c0_2 = arith.constant 0 : index
    %1 = vector.load %arg2[%c0_1, %c0_2] : memref<288x128xbf16, #tpu.memory_space<vmem>>, vector<288x128xbf16>
    %cst = arith.constant dense<0.000000e+00> : vector<16x128xf32>
    %2 = tpu.matmul %0, %1, %cst {dimension_numbers = #tpu.dot_dimension_numbers<[1], [0], [0], [1], [0, 0, 1, 1], [], []>} : vector<16x288xbf16>, vector<288x128xbf16>, vector<16x128xf32> -> vector<16x128xf32>
    %c0_3 = arith.constant 0 : index
    %c0_4 = arith.constant 0 : index
    %3 = vector.load %arg3[%c0_3, %c0_4] : memref<1x128xf32, #tpu.memory_space<vmem>>, vector<1x128xf32>
    %4 = vector.broadcast %3 : vector<1x128xf32> to vector<16x128xf32>
    %5 = arith.addf %2, %4 : vector<16x128xf32>
    %cst_5 = arith.constant 0.000000e+00 : f32
    %6 = vector.broadcast %cst_5 : f32 to vector<16x128xf32>
    %7 = arith.maximumf %5, %6 : vector<16x128xf32>
    %8 = arith.truncf %7 : vector<16x128xf32> to vector<16x128xbf16>
    %c0_6 = arith.constant 0 : index
    %c0_7 = arith.constant 0 : index
    %9 = vector.load %arg4[%c0_6, %c0_7] : memref<16x128xbf16, #tpu.memory_space<vmem>>, vector<16x128xbf16>
    tpu.vector_store %arg4[%c0_6, %c0_7], %8 {strides = array<i32>} : memref<16x128xbf16, #tpu.memory_space<vmem>>, vector<16x128xbf16>,
    return
  }
  func.func @transform_0(%arg0: i32) -> (i32, i32) {
    %c0_i32 = arith.constant 0 : i32
    %c0_i32_0 = arith.constant 0 : i32
    return %arg0, %c0_i32 : i32, i32
  }
  func.func @transform_1(%arg0: i32) -> (i32, i32) {
    %c0_i32 = arith.constant 0 : i32
    %c0_i32_0 = arith.constant 0 : i32
    %c0_i32_1 = arith.constant 0 : i32
    return %c0_i32, %c0_i32_0 : i32, i32
  }
  func.func @transform_2(%arg0: i32) -> (i32, i32) {
    %c0_i32 = arith.constant 0 : i32
    %c0_i32_0 = arith.constant 0 : i32
    %c0_i32_1 = arith.constant 0 : i32
    return %c0_i32, %c0_i32_0 : i32, i32
  }
  func.func @transform_3(%arg0: i32) -> (i32, i32) {
    %c0_i32 = arith.constant 0 : i32
    %c0_i32_0 = arith.constant 0 : i32
    return %arg0, %c0_i32 : i32, i32
  }
}

module attributes {stable_mosaic.version = 11 : i64} {
  func.func @_head_kernel(%arg0: i32, %arg1: memref<16x512xbf16, #tpu.memory_space<vmem>>, %arg2: memref<512x128xbf16, #tpu.memory_space<vmem>>, %arg3: memref<1x128xf32, #tpu.memory_space<vmem>>, %arg4: memref<128x128xf32, #tpu.memory_space<vmem>>, %arg5: memref<1x128xf32, #tpu.memory_space<vmem>>, %arg6: memref<16x512xf32, #tpu.memory_space<vmem>>) attributes {dimension_semantics = [#tpu.dimension_semantics<parallel>], iteration_bounds = array<i64: 1>, scalar_prefetch = 0 : i64, scratch_operands = 0 : i64, tpu.core_type = #tpu.core_type<tc>, window_params = [{transform_indices = @transform_0, window_bounds = array<i64: 16, 512>}, {pipeline_mode = #tpu.pipeline_mode<synchronous>, transform_indices = @transform_1, window_bounds = array<i64: 512, 128>}, {pipeline_mode = #tpu.pipeline_mode<synchronous>, transform_indices = @transform_2, window_bounds = array<i64: 1, 128>}, {pipeline_mode = #tpu.pipeline_mode<synchronous>, transform_indices = @transform_3, window_bounds = array<i64: 128, 128>}, {pipeline_mode = #tpu.pipeline_mode<synchronous>, transform_indices = @transform_4, window_bounds = array<i64: 1, 128>}, {transform_indices = @transform_5, window_bounds = array<i64: 16, 512>}]} {
    %c0 = arith.constant 0 : index
    %c0_0 = arith.constant 0 : index
    %0 = vector.load %arg3[%c0, %c0_0] : memref<1x128xf32, #tpu.memory_space<vmem>>, vector<1x128xf32>
    %c0_1 = arith.constant 0 : index
    %c0_2 = arith.constant 0 : index
    %1 = vector.load %arg1[%c0_1, %c0_2] : memref<16x512xbf16, #tpu.memory_space<vmem>>, vector<16x128xbf16>
    %c0_3 = arith.constant 0 : index
    %c0_4 = arith.constant 0 : index
    %2 = vector.load %arg2[%c0_3, %c0_4] : memref<512x128xbf16, #tpu.memory_space<vmem>>, vector<128x128xbf16>
    %cst = arith.constant dense<0.000000e+00> : vector<16x128xf32>
    %3 = tpu.matmul %1, %2, %cst {dimension_numbers = #tpu.dot_dimension_numbers<[1], [0], [0], [1], [0, 0, 1, 1], [], []>} : vector<16x128xbf16>, vector<128x128xbf16>, vector<16x128xf32> -> vector<16x128xf32>
    %4 = vector.broadcast %0 : vector<1x128xf32> to vector<16x128xf32>
    %5 = arith.addf %3, %4 : vector<16x128xf32>
    %cst_5 = arith.constant 0.000000e+00 : f32
    %6 = vector.broadcast %cst_5 : f32 to vector<16x128xf32>
    %7 = arith.maximumf %5, %6 : vector<16x128xf32>
    %c0_6 = arith.constant 0 : index
    %c128 = arith.constant 128 : index
    %8 = vector.load %arg1[%c0_6, %c128] : memref<16x512xbf16, #tpu.memory_space<vmem>>, vector<16x128xbf16>
    %c128_7 = arith.constant 128 : index
    %c0_8 = arith.constant 0 : index
    %9 = vector.load %arg2[%c128_7, %c0_8] : memref<512x128xbf16, #tpu.memory_space<vmem>>, vector<128x128xbf16>
    %cst_9 = arith.constant dense<0.000000e+00> : vector<16x128xf32>
    %10 = tpu.matmul %8, %9, %cst_9 {dimension_numbers = #tpu.dot_dimension_numbers<[1], [0], [0], [1], [0, 0, 1, 1], [], []>} : vector<16x128xbf16>, vector<128x128xbf16>, vector<16x128xf32> -> vector<16x128xf32>
    %11 = vector.broadcast %0 : vector<1x128xf32> to vector<16x128xf32>
    %12 = arith.addf %10, %11 : vector<16x128xf32>
    %cst_10 = arith.constant 0.000000e+00 : f32
    %13 = vector.broadcast %cst_10 : f32 to vector<16x128xf32>
    %14 = arith.maximumf %12, %13 : vector<16x128xf32>
    %c0_11 = arith.constant 0 : index
    %c256 = arith.constant 256 : index
    %15 = vector.load %arg1[%c0_11, %c256] : memref<16x512xbf16, #tpu.memory_space<vmem>>, vector<16x128xbf16>
    %c256_12 = arith.constant 256 : index
    %c0_13 = arith.constant 0 : index
    %16 = vector.load %arg2[%c256_12, %c0_13] : memref<512x128xbf16, #tpu.memory_space<vmem>>, vector<128x128xbf16>
    %cst_14 = arith.constant dense<0.000000e+00> : vector<16x128xf32>
    %17 = tpu.matmul %15, %16, %cst_14 {dimension_numbers = #tpu.dot_dimension_numbers<[1], [0], [0], [1], [0, 0, 1, 1], [], []>} : vector<16x128xbf16>, vector<128x128xbf16>, vector<16x128xf32> -> vector<16x128xf32>
    %18 = vector.broadcast %0 : vector<1x128xf32> to vector<16x128xf32>
    %19 = arith.addf %17, %18 : vector<16x128xf32>
    %cst_15 = arith.constant 0.000000e+00 : f32
    %20 = vector.broadcast %cst_15 : f32 to vector<16x128xf32>
    %21 = arith.maximumf %19, %20 : vector<16x128xf32>
    %c0_16 = arith.constant 0 : index
    %c384 = arith.constant 384 : index
    %22 = vector.load %arg1[%c0_16, %c384] : memref<16x512xbf16, #tpu.memory_space<vmem>>, vector<16x128xbf16>
    %c384_17 = arith.constant 384 : index
    %c0_18 = arith.constant 0 : index
    %23 = vector.load %arg2[%c384_17, %c0_18] : memref<512x128xbf16, #tpu.memory_space<vmem>>, vector<128x128xbf16>
    %cst_19 = arith.constant dense<0.000000e+00> : vector<16x128xf32>
    %24 = tpu.matmul %22, %23, %cst_19 {dimension_numbers = #tpu.dot_dimension_numbers<[1], [0], [0], [1], [0, 0, 1, 1], [], []>} : vector<16x128xbf16>, vector<128x128xbf16>, vector<16x128xf32> -> vector<16x128xf32>
    %25 = vector.broadcast %0 : vector<1x128xf32> to vector<16x128xf32>
    %26 = arith.addf %24, %25 : vector<16x128xf32>
    %cst_20 = arith.constant 0.000000e+00 : f32
    %27 = vector.broadcast %cst_20 : f32 to vector<16x128xf32>
    %28 = arith.maximumf %26, %27 : vector<16x128xf32>
    %29 = tpu.concatenate %7, %14, %21, %28 in 0 : vector<16x128xf32>, vector<16x128xf32>, vector<16x128xf32>, vector<16x128xf32> -> vector<64x128xf32>
    %c0_21 = arith.constant 0 : index
    %c0_22 = arith.constant 0 : index
    %30 = vector.load %arg4[%c0_21, %c0_22] : memref<128x128xf32, #tpu.memory_space<vmem>>, vector<128x128xf32>
    %cst_23 = arith.constant dense<0.000000e+00> : vector<64x128xf32>
    %31 = tpu.matmul %29, %30, %cst_23 {dimension_numbers = #tpu.dot_dimension_numbers<[1], [0], [0], [1], [0, 0, 1, 1], [], []>} : vector<64x128xf32>, vector<128x128xf32>, vector<64x128xf32> -> vector<64x128xf32>
    %c0_24 = arith.constant 0 : index
    %c0_25 = arith.constant 0 : index
    %32 = vector.load %arg5[%c0_24, %c0_25] : memref<1x128xf32, #tpu.memory_space<vmem>>, vector<1x128xf32>
    %33 = vector.broadcast %32 : vector<1x128xf32> to vector<64x128xf32>
    %34 = arith.addf %31, %33 : vector<64x128xf32>
    %35 = vector.extract_strided_slice %34 {offsets = [0, 0], sizes = [16, 128], strides = [1, 1]} : vector<64x128xf32> to vector<16x128xf32>
    %c0_26 = arith.constant 0 : index
    %c0_27 = arith.constant 0 : index
    %36 = vector.load %arg6[%c0_26, %c0_27] : memref<16x512xf32, #tpu.memory_space<vmem>>, vector<16x128xf32>
    tpu.vector_store %arg6[%c0_26, %c0_27], %35 {strides = array<i32>} : memref<16x512xf32, #tpu.memory_space<vmem>>, vector<16x128xf32>,
    %37 = vector.extract_strided_slice %34 {offsets = [16, 0], sizes = [16, 128], strides = [1, 1]} : vector<64x128xf32> to vector<16x128xf32>
    %c0_28 = arith.constant 0 : index
    %c128_29 = arith.constant 128 : index
    %38 = vector.load %arg6[%c0_28, %c128_29] : memref<16x512xf32, #tpu.memory_space<vmem>>, vector<16x128xf32>
    tpu.vector_store %arg6[%c0_28, %c128_29], %37 {strides = array<i32>} : memref<16x512xf32, #tpu.memory_space<vmem>>, vector<16x128xf32>,
    %39 = vector.extract_strided_slice %34 {offsets = [32, 0], sizes = [16, 128], strides = [1, 1]} : vector<64x128xf32> to vector<16x128xf32>
    %c0_30 = arith.constant 0 : index
    %c256_31 = arith.constant 256 : index
    %40 = vector.load %arg6[%c0_30, %c256_31] : memref<16x512xf32, #tpu.memory_space<vmem>>, vector<16x128xf32>
    tpu.vector_store %arg6[%c0_30, %c256_31], %39 {strides = array<i32>} : memref<16x512xf32, #tpu.memory_space<vmem>>, vector<16x128xf32>,
    %41 = vector.extract_strided_slice %34 {offsets = [48, 0], sizes = [16, 128], strides = [1, 1]} : vector<64x128xf32> to vector<16x128xf32>
    %c0_32 = arith.constant 0 : index
    %c384_33 = arith.constant 384 : index
    %42 = vector.load %arg6[%c0_32, %c384_33] : memref<16x512xf32, #tpu.memory_space<vmem>>, vector<16x128xf32>
    tpu.vector_store %arg6[%c0_32, %c384_33], %41 {strides = array<i32>} : memref<16x512xf32, #tpu.memory_space<vmem>>, vector<16x128xf32>,
    return
  }
  func.func @transform_0(%arg0: i32) -> (i32, i32) {
    %c0_i32 = arith.constant 0 : i32
    %c0_i32_0 = arith.constant 0 : i32
    return %arg0, %c0_i32 : i32, i32
  }
  func.func @transform_1(%arg0: i32) -> (i32, i32) {
    %c0_i32 = arith.constant 0 : i32
    %c0_i32_0 = arith.constant 0 : i32
    %c0_i32_1 = arith.constant 0 : i32
    return %c0_i32, %c0_i32_0 : i32, i32
  }
  func.func @transform_2(%arg0: i32) -> (i32, i32) {
    %c0_i32 = arith.constant 0 : i32
    %c0_i32_0 = arith.constant 0 : i32
    %c0_i32_1 = arith.constant 0 : i32
    return %c0_i32, %c0_i32_0 : i32, i32
  }
  func.func @transform_3(%arg0: i32) -> (i32, i32) {
    %c0_i32 = arith.constant 0 : i32
    %c0_i32_0 = arith.constant 0 : i32
    %c0_i32_1 = arith.constant 0 : i32
    return %c0_i32, %c0_i32_0 : i32, i32
  }
  func.func @transform_4(%arg0: i32) -> (i32, i32) {
    %c0_i32 = arith.constant 0 : i32
    %c0_i32_0 = arith.constant 0 : i32
    %c0_i32_1 = arith.constant 0 : i32
    return %c0_i32, %c0_i32_0 : i32, i32
  }
  func.func @transform_5(%arg0: i32) -> (i32, i32) {
    %c0_i32 = arith.constant 0 : i32
    %c0_i32_0 = arith.constant 0 : i32
    return %arg0, %c0_i32 : i32, i32
  }
}

</mosaic_0001>

<llo_original>
// kernel: a_call__.4
$region0: #{a_call__.4}
  #allocation0 [shape = 'u32[]', space=smem, size = 0x4, offset = 0x4, fixed_abs, tag = 'smem constant byte address 0x4 - core index']
  #allocation1 [shape = 'u32[144,128]{1,0:T(1,128)}', space=vmem, size = 0x12000, scoped, tag = 'internal scratch']
  %s0 = inlined_call_operand.vmem [shape: bf16[128,32], index: 0, kind: input, shape index: {}]
  %s1 = inlined_call_operand.vmem [shape: bf16[32,128], index: 1, kind: input, shape index: {}]
  %s2 = inlined_call_operand.vmem [shape: f32[1,128], index: 2, kind: input, shape index: {}]
  %s3 = inlined_call_operand.vmem [shape: bf16[128,128], index: 3, kind: output, shape index: {}]
  %s4 = sld [smem:[#allocation0]]
  $region45: #{a_call__.4} parent=0
    _
  %s6 = ssub.s32 1, %s4
  %s7 = scalar_select 0, %s6, %s4
  loop: start=0, step=1, limit=4
  $region2: #{a_call__.4} parent=0 // loop_pre_header
    _
  $region3: #{a_call__.4} parent=0 // loop_header
    %s9 = sphi 0, %s13
    %p10 = scmp.ge.s32.totalorder %s9, 4
    %s19 = sphi 0, %s21
    %s22 = sphi 0, %s19
    %s23 = sphi 0, %s22
    %s39 = sphi 0, %s23
    %s43 = sphi 0, %s43
    %s45 = sphi 0, %s43
    %s46 = sphi 0, %s45
    %s60 = sphi 0, %s46
    %s64 = sphi 0, %s64
    %s66 = sphi 0, %s64
    %s67 = sphi 0, %s66
    %s81 = sphi 0, %s67
    %s87 = sphi 0, %s89
    %s90 = sphi 0, %s87
    %s91 = sphi 0, %s90
    %s107 = sphi 0, %s91
  $region4: #{a_call__.4} parent=0 // loop_header_branch
    %12 = sbr.rel (%p10) target = $region8
  $region5: #{a_call__.4} parent=0 // loop_body
    %s14 = ssub.s32 %s9, 1
    %s15 = ssub.s32 %s9, 2
    %s16 = sadd.s32 %s9, 1
    %s17 = ssub.s32 %s9, %s16
    %p18 = scmp.eq.s32.totalorder %s17, 0
    %s20 = sadd.s32 %s19, 1
    %s21 = scalar_select %p18, %s19, %s20
    %p24 = pneg %p18
    %p25 = scmp.eq.s32.totalorder %s9, 1
    %p26 = por %p24, %p25
    %p27 = scmp.ne.s32.totalorder %s19, %s22
    %p28 = scmp.eq.s32.totalorder %s9, 0
    %p29 = por %p27, %p28
    %p30 = scmp.ne.s32.totalorder %s19, %s22
    %p31 = scmp.eq.s32.totalorder %s14, 1
    %p32 = por %p30, %p31
    %p33 = scmp.ne.s32.totalorder %s22, %s23
    %p34 = scmp.eq.s32.totalorder %s14, 0
    %p35 = por %p33, %p34
    %p36 = scmp.ne.s32.totalorder %s22, %s23
    %p37 = scmp.eq.s32.totalorder %s15, 1
    %p38 = por %p36, %p37
    %p40 = scmp.ne.s32.totalorder %s23, %s39
    %p41 = scmp.eq.s32.totalorder %s15, 0
    %p42 = por %p40, %p41
    %s44 = sadd.s32 %s43, 1
    %p47 = scmp.eq.s32.totalorder %s9, 1
    %p48 = scmp.ne.s32.totalorder %s43, %s45
    %p49 = scmp.eq.s32.totalorder %s9, 0
    %p50 = por %p48, %p49
    %p51 = scmp.ne.s32.totalorder %s43, %s45
    %p52 = scmp.eq.s32.totalorder %s14, 1
    %p53 = por %p51, %p52
    %p54 = scmp.ne.s32.totalorder %s45, %s46
    %p55 = scmp.eq.s32.totalorder %s14, 0
    %p56 = por %p54, %p55
    %p57 = scmp.ne.s32.totalorder %s45, %s46
    %p58 = scmp.eq.s32.totalorder %s15, 1
    %p59 = por %p57, %p58
    %p61 = scmp.ne.s32.totalorder %s46, %s60
    %p62 = scmp.eq.s32.totalorder %s15, 0
    %p63 = por %p61, %p62
    %s65 = sadd.s32 %s64, 1
    %p68 = scmp.eq.s32.totalorder %s9, 1
    %p69 = scmp.ne.s32.totalorder %s64, %s66
    %p70 = scmp.eq.s32.totalorder %s9, 0
    %p71 = por %p69, %p70
    %p72 = scmp.ne.s32.totalorder %s64, %s66
    %p73 = scmp.eq.s32.totalorder %s14, 1
    %p74 = por %p72, %p73
    %p75 = scmp.ne.s32.totalorder %s66, %s67
    %p76 = scmp.eq.s32.totalorder %s14, 0
    %p77 = por %p75, %p76
    %p78 = scmp.ne.s32.totalorder %s66, %s67
    %p79 = scmp.eq.s32.totalorder %s15, 1
    %p80 = por %p78, %p79
    %p82 = scmp.ne.s32.totalorder %s67, %s81
    %p83 = scmp.eq.s32.totalorder %s15, 0
    %p84 = por %p82, %p83
    %s85 = ssub.s32 %s9, %s16
    %p86 = scmp.eq.s32.totalorder %s85, 0
    %s88 = sadd.s32 %s87, 1
    %s89 = scalar_select %p86, %s87, %s88
    %p92 = pneg %p86
    %p93 = scmp.eq.s32.totalorder %s9, 1
    %p94 = por %p92, %p93
    %p95 = scmp.ne.s32.totalorder %s87, %s90
    %p96 = scmp.eq.s32.totalorder %s9, 0
    %p97 = por %p95, %p96
    %p98 = scmp.ne.s32.totalorder %s87, %s90
    %p99 = scmp.eq.s32.totalorder %s14, 1
    %p100 = por %p98, %p99
    %p101 = scmp.ne.s32.totalorder %s90, %s91
    %p102 = scmp.eq.s32.totalorder %s14, 0
    %p103 = por %p101, %p102
    %p104 = scmp.ne.s32.totalorder %s90, %s91
    %p105 = scmp.eq.s32.totalorder %s15, 1
    %p106 = por %p104, %p105
    %p108 = scmp.ne.s32.totalorder %s91, %s107
    %p109 = scmp.eq.s32.totalorder %s15, 0
    %p110 = por %p108, %p109
    %p111 = scmp.le.s32.totalorder 1, %s9
    %p112 = scmp.lt.s32.totalorder %s9, 3
    %p113 = pnand %p111, %p112
    %p114 = pneg %p113
    // Predicated region
    $region9: #{a_call__.4} parent=5 // pred_check
      _
    $region10: #{a_call__.4} parent=5 // pred_check_branch
      %116 = sbr.rel (%p113) target = $region12
    $region11: #{a_call__.4} parent=5 // pred_region
      %s117 = ssub.s32 %s9, 1
      // Predicated region
      $region13: #{a_call__.4} parent=11 // pred_check
        %p118 = pneg %p56
      $region14: #{a_call__.4} parent=11 // pred_check_branch
        %120 = sbr.rel (%p118) target = $region16
      $region15: #{a_call__.4} parent=11 // pred_region
        _
      $region16: #{a_call__.4} parent=11 // pred_fallthru
        _
      // Predicated region
      $region17: #{a_call__.4} parent=11 // pred_check
        %p121 = pneg %p77
      $region18: #{a_call__.4} parent=11 // pred_check_branch
        %123 = sbr.rel (%p121) target = $region20
      $region19: #{a_call__.4} parent=11 // pred_region
        _
      $region20: #{a_call__.4} parent=11 // pred_fallthru
        _
    $region12: #{a_call__.4} parent=5 // pred_fallthru
      _
    %p124 = scmp.lt.s32.totalorder %s9, 2
    // Predicated region
    $region21: #{a_call__.4} parent=5 // pred_check
      %p125 = pneg %p124
    $region22: #{a_call__.4} parent=5 // pred_check_branch
      %127 = sbr.rel (%p125) target = $region24
    $region23: #{a_call__.4} parent=5 // pred_region
      // Predicated region
      $region25: #{a_call__.4} parent=23 // pred_check
        %p128 = pneg %p29
      $region26: #{a_call__.4} parent=23 // pred_check_branch
        %130 = sbr.rel (%p128) target = $region28
      $region27: #{a_call__.4} parent=23 // pred_region
        %s131 = smul.u32 8, %s9
        %p132 = scmp.lt.s32.totalorder %s131, 15
        %s133 = scalar_select %p132, %s131, 15
        %s134 = smul.addr %s133, 4
        %s135 = scalar_lea.vmem %s0, %s134
        %s136 = smul.u32 8, %s9
      $region28: #{a_call__.4} parent=23 // pred_fallthru
        _
    $region24: #{a_call__.4} parent=5 // pred_fallthru
      _
    %p137 = scmp.le.s32.totalorder 1, %s9
    %p138 = scmp.lt.s32.totalorder %s9, 3
    %p139 = pnand %p137, %p138
    %p140 = pneg %p139
    // Predicated region
    $region29: #{a_call__.4} parent=5 // pred_check
      _
    $region30: #{a_call__.4} parent=5 // pred_check_branch
      %142 = sbr.rel (%p139) target = $region32
    $region31: #{a_call__.4} parent=5 // pred_region
      %s143 = ssub.s32 %s9, 1
      %s144 = smul.u32 8, %s14
      %p145 = scmp.lt.s32.totalorder %s144, 15
      %s146 = scalar_select %p145, %s144, 15
      %s147 = smul.addr %s146, 4
      %s148 = scalar_lea.vmem %s0, %s147
      %p149 = pneg %p35
      %p150 = pneg %p32
      %p151 = pneg %p56
      %p152 = pneg %p53
      %p153 = pneg %p77
      %p154 = pneg %p74
      %p155 = pneg %p103
      %p156 = pneg %p100
      %s157 = smul.u32 8, %s14
      %p158 = scmp.lt.s32.totalorder %s157, 15
      %s159 = scalar_select %p158, %s157, 15
      %s160 = smul.addr %s159, 4
      %s161 = scalar_lea.vmem %s3, %s160
      %s162 = smul.u32 8, %s14
      %p163 = scmp.lt.s32.totalorder %s162, 15
      %s164 = scalar_select %p163, %s162, 15
      %s165 = smul.addr %s164, 4
      %s166 = scalar_lea.vmem %s0, %s165
      %s167 = smul.u32 8, %s14
      %s168 = smul.u32 8, %s14
      %p169 = scmp.lt.s32.totalorder %s168, 15
      %s170 = scalar_select %p169, %s168, 15
      %s171 = smul.addr %s170, 4
      %s172 = scalar_lea.vmem %s3, %s171
      %s173 = smul.u32 8, %s14
      %v175 = vld [vmem:[%s166] sm:$0xf]
      %v176 = vld [vmem:[%s166 + $0x4] sm:$0xf]
      %v177 = vld [vmem:[%s166 + $0x8] sm:$0xf]
      %v178 = vld [vmem:[%s166 + $0xc] sm:$0xf]
      %v179 = vld [vmem:[%s166 + $0x10] sm:$0xf]
      %v180 = vld [vmem:[%s166 + $0x14] sm:$0xf]
      %v181 = vld [vmem:[%s166 + $0x18] sm:$0xf]
      %v182 = vld [vmem:[%s166 + $0x1c] sm:$0xf]
      %v183 = vld [vmem:[%s1] sm:$0xf]
      %v184 = vld [vmem:[%s1 + $0x4] sm:$0xf]
      %v185 = vld [vmem:[%s1 + $0x8] sm:$0xf]
      %v186 = vld [vmem:[%s1 + $0xc] sm:$0xf]
      %v187 = vld [vmem:[%s2] sm:$0x1]
      %v189 = vlaneseq
      %v190 = vshrl.u32 %v189, 7
      %v191 = vsub.s32 0, %v190
      %v192 = vrot.slane %v187, %v191
      %v202 = vunpack.c.l.b16 %v175
      %v203 = vunpack.c.l.b16 %v176
      %v204 = vunpack.c.l.b16 %v177
      %v205 = vunpack.c.l.b16 %v178
      %v206 = vunpack.c.l.b16 %v179
      %v207 = vunpack.c.l.b16 %v180
      %v208 = vunpack.c.l.b16 %v181
      %v209 = vunpack.c.l.b16 %v182
      %v210 = vpack.c.b16 %v203, %v202
      %v211 = vpack.c.b16 %v205, %v204
      %v212 = vpack.c.b16 %v207, %v206
      %v213 = vpack.c.b16 %v209, %v208
      %v218 = vunpack.c.l.b16 %v183
      %v219 = vunpack.c.l.b16 %v184
      %v220 = vunpack.c.l.b16 %v185
      %v221 = vunpack.c.l.b16 %v186
      %v222 = vpack.c.b16 %v219, %v218
      %v223 = vpack.c.b16 %v221, %v220
      %vm226 = vcmask 261120
      %v228 = vsel %vm226, %v210, 0
      %v231 = vsel %vm226, %v211, 0
      %v234 = vsel %vm226, %v212, 0
      %v237 = vsel %vm226, %v213, 0
      %239 = vmatprep.subr.bf16.mxu0 0
      %240 = vmatpush1.bf16.msra.mxu0 0
      %241 = vmatprep.subr.bf16.mxu0 0
      %242 = vmatpush1.bf16.msra.mxu0 0
      %243 = vmatprep.subr.bf16.mxu0 0
      %244 = vmatpush1.bf16.msra.mxu0 0
      %245 = vmatprep.subr.bf16.mxu0 0
      %246 = vmatpush1.bf16.msra.mxu0 0
      %247 = vmatprep.subr.bf16.mxu0 0
      %248 = vmatpush1.bf16.msra.mxu0 0
      %249 = vmatprep.subr.bf16.mxu0 0
      %250 = vmatpush1.bf16.msra.mxu0 0
      %251 = vmatprep.subr.bf16.mxu0 0
      %252 = vmatpush1.bf16.msra.mxu0 %v223
      %253 = vmatprep.subr.bf16.mxu0 0
      %254 = vmatpush1.bf16.msra.mxu0 %v222
      %255 = vmatprep.subr.bf16.mxu0 0
      %256 = vmatpush2.bf16.msra.mxu0 0
      %257 = vmatprep.subr.bf16.mxu0 0
      %258 = vmatpush2.bf16.msra.mxu0 0
      %259 = vmatprep.subr.bf16.mxu0 0
      %260 = vmatpush2.bf16.msra.mxu0 0
      %261 = vmatprep.subr.bf16.mxu0 0
      %262 = vmatpush2.bf16.msra.mxu0 0
      %263 = vmatprep.subr.bf16.mxu0 0
      %264 = vmatpush2.bf16.msra.mxu0 0
      %265 = vmatprep.subr.bf16.mxu0 0
      %266 = vmatpush2.bf16.msra.mxu0 0
      %267 = vmatprep.subr.bf16.mxu0 0
      %268 = vmatpush2.bf16.msra.mxu0 0
      %269 = vmatprep.subr.bf16.mxu0 0
      %270 = vmatpush2.bf16.msra.mxu0 0
      %271 = vmatprep.mubr.bf16.mxu0 0
      %272 = vmatmul.mubr.bf16.gmra.mxu0 %v228
      %v273 = vpop.f32.mrf.mxu0
      %v274 = vadd.f32 %v192, %v273
      %v275 = vpop.f32.mrf.mxu0
      %v276 = vpop.f32.mrf.mxu0
      %v277 = vadd.f32 %v192, %v276
      %v278 = vpop.f32.mrf.mxu0
      %279 = vmatprep.mubr.bf16.mxu0 0
      %280 = vmatmul.mubr.bf16.gmra.mxu0 %v231
      %v281 = vpop.f32.mrf.mxu0
      %v282 = vadd.f32 %v192, %v281
      %v283 = vpop.f32.mrf.mxu0
      %v284 = vpop.f32.mrf.mxu0
      %v285 = vadd.f32 %v192, %v284
      %v286 = vpop.f32.mrf.mxu0
      %287 = vmatprep.mubr.bf16.mxu0 0
      %288 = vmatmul.mubr.bf16.gmra.mxu0 %v234
      %v289 = vpop.f32.mrf.mxu0
      %v290 = vadd.f32 %v192, %v289
      %v291 = vpop.f32.mrf.mxu0
      %v292 = vpop.f32.mrf.mxu0
      %v293 = vadd.f32 %v192, %v292
      %v294 = vpop.f32.mrf.mxu0
      %295 = vmatprep.mubr.bf16.mxu0 0
      %296 = vmatmul.mubr.bf16.gmra.mxu0 %v237
      %v297 = vpop.f32.mrf.mxu0
      %v298 = vadd.f32 %v192, %v297
      %v299 = vpop.f32.mrf.mxu0
      %v300 = vpop.f32.mrf.mxu0
      %v301 = vadd.f32 %v192, %v300
      %v302 = vpop.f32.mrf.mxu0
      %303 = vdwg.mxu0
      %v304 = vmax.f32 %v274, 0.0
      %v305 = vmax.f32 %v277, 0.0
      %v306 = vmax.f32 %v282, 0.0
      %v307 = vmax.f32 %v285, 0.0
      %v308 = vmax.f32 %v290, 0.0
      %v309 = vmax.f32 %v293, 0.0
      %v310 = vmax.f32 %v298, 0.0
      %v311 = vmax.f32 %v301, 0.0
      %v312 = vpack.c.bf16 %v305, %v304
      %v313 = vpack.c.bf16 %v307, %v306
      %v314 = vpack.c.bf16 %v309, %v308
      %v315 = vpack.c.bf16 %v311, %v310
      %v320 = vunpack.c.l.b16 %v312
      %v321 = vunpack.c.h.b16 %v312
      %v322 = vunpack.c.l.b16 %v313
      %v323 = vunpack.c.h.b16 %v313
      %v324 = vunpack.c.l.b16 %v314
      %v325 = vunpack.c.h.b16 %v314
      %v326 = vunpack.c.l.b16 %v315
      %v327 = vunpack.c.h.b16 %v315
      %v328 = vpack.c.b16 %v320, %v320
      %v329 = vpack.c.b16 %v321, %v321
      %v330 = vpack.c.b16 %v322, %v322
      %v331 = vpack.c.b16 %v323, %v323
      %v332 = vpack.c.b16 %v324, %v324
      %v333 = vpack.c.b16 %v325, %v325
      %v334 = vpack.c.b16 %v326, %v326
      %v335 = vpack.c.b16 %v327, %v327
      %344 = vst [vmem:[%s172] sm:$0xf] %v328
      %345 = vst [vmem:[%s172 + $0x4] sm:$0xf] %v329
      %346 = vst [vmem:[%s172 + $0x8] sm:$0xf] %v330
      %347 = vst [vmem:[%s172 + $0xc] sm:$0xf] %v331
      %348 = vst [vmem:[%s172 + $0x10] sm:$0xf] %v332
      %349 = vst [vmem:[%s172 + $0x14] sm:$0xf] %v333
      %350 = vst [vmem:[%s172 + $0x18] sm:$0xf] %v334
      %351 = vst [vmem:[%s172 + $0x1c] sm:$0xf] %v335
      %s352 = smul.u32 8, %s14
      %p353 = scmp.lt.s32.totalorder %s352, 15
      %s354 = scalar_select %p353, %s352, 15
      %s355 = smul.addr %s354, 4
      %s356 = scalar_lea.vmem %s3, %s355
      // Predicated region
      $region33: #{a_call__.4} parent=31 // pred_check
        %p357 = pneg %p100
      $region34: #{a_call__.4} parent=31 // pred_check_branch
        %359 = sbr.rel (%p357) target = $region36
      $region35: #{a_call__.4} parent=31 // pred_region
        %s360 = smul.u32 8, %s14
      $region36: #{a_call__.4} parent=31 // pred_fallthru
        _
    $region32: #{a_call__.4} parent=5 // pred_fallthru
      _
    %p361 = scmp.le.s32.totalorder 2, %s9
    // Predicated region
    $region37: #{a_call__.4} parent=5 // pred_check
      %p362 = pneg %p361
    $region38: #{a_call__.4} parent=5 // pred_check_branch
      %364 = sbr.rel (%p362) target = $region40
    $region39: #{a_call__.4} parent=5 // pred_region
      %s365 = ssub.s32 %s9, 2
      // Predicated region
      $region41: #{a_call__.4} parent=39 // pred_check
        %p366 = pneg %p106
      $region42: #{a_call__.4} parent=39 // pred_check_branch
        %368 = sbr.rel (%p366) target = $region44
      $region43: #{a_call__.4} parent=39 // pred_region
        %s369 = smul.u32 8, %s15
        %p370 = scmp.lt.s32.totalorder %s369, 15
        %s371 = scalar_select %p370, %s369, 15
        %s372 = smul.addr %s371, 4
        %s373 = scalar_lea.vmem %s3, %s372
      $region44: #{a_call__.4} parent=39 // pred_fallthru
        _
    $region40: #{a_call__.4} parent=5 // pred_fallthru
      _
  $region6: #{a_call__.4} parent=0 // loop_footer
    %s13 = sadd.s32 1, %s9
  $region7: #{a_call__.4} parent=0 // loop_footer_branch
    %8 = sbr.rel target = $region3
  $region8: #{a_call__.4} parent=0 // loop_exit
    _

// kernel: a_call__.5
$region0: #{a_call__.5}
  #allocation0 [shape = 'u32[]', space=smem, size = 0x4, offset = 0x4, fixed_abs, tag = 'smem constant byte address 0x4 - core index']
  #allocation1 [shape = 'u32[144,128]{1,0:T(1,128)}', space=vmem, size = 0x12000, scoped, tag = 'internal scratch']
  %s0 = inlined_call_operand.vmem [shape: bf16[32,144], index: 0, kind: input, shape index: {}]
  %s1 = inlined_call_operand.vmem [shape: bf16[144,128], index: 1, kind: input, shape index: {}]
  %s2 = inlined_call_operand.vmem [shape: f32[1,128], index: 2, kind: input, shape index: {}]
  %s3 = inlined_call_operand.vmem [shape: bf16[32,128], index: 3, kind: output, shape index: {}]
  %s4 = sld [smem:[#allocation0]]
  $region45: #{a_call__.5} parent=0
    _
  %s6 = ssub.s32 1, %s4
  %s7 = scalar_select 0, %s6, %s4
  loop: start=0, step=1, limit=4
  $region2: #{a_call__.5} parent=0 // loop_pre_header
    _
  $region3: #{a_call__.5} parent=0 // loop_header
    %s9 = sphi 0, %s13
    %p10 = scmp.ge.s32.totalorder %s9, 4
    %s19 = sphi 0, %s21
    %s22 = sphi 0, %s19
    %s23 = sphi 0, %s22
    %s39 = sphi 0, %s23
    %s43 = sphi 0, %s43
    %s45 = sphi 0, %s43
    %s46 = sphi 0, %s45
    %s60 = sphi 0, %s46
    %s64 = sphi 0, %s64
    %s66 = sphi 0, %s64
    %s67 = sphi 0, %s66
    %s81 = sphi 0, %s67
    %s87 = sphi 0, %s89
    %s90 = sphi 0, %s87
    %s91 = sphi 0, %s90
    %s107 = sphi 0, %s91
  $region4: #{a_call__.5} parent=0 // loop_header_branch
    %12 = sbr.rel (%p10) target = $region8
  $region5: #{a_call__.5} parent=0 // loop_body
    %s14 = ssub.s32 %s9, 1
    %s15 = ssub.s32 %s9, 2
    %s16 = sadd.s32 %s9, 1
    %s17 = ssub.s32 %s9, %s16
    %p18 = scmp.eq.s32.totalorder %s17, 0
    %s20 = sadd.s32 %s19, 1
    %s21 = scalar_select %p18, %s19, %s20
    %p24 = pneg %p18
    %p25 = scmp.eq.s32.totalorder %s9, 1
    %p26 = por %p24, %p25
    %p27 = scmp.ne.s32.totalorder %s19, %s22
    %p28 = scmp.eq.s32.totalorder %s9, 0
    %p29 = por %p27, %p28
    %p30 = scmp.ne.s32.totalorder %s19, %s22
    %p31 = scmp.eq.s32.totalorder %s14, 1
    %p32 = por %p30, %p31
    %p33 = scmp.ne.s32.totalorder %s22, %s23
    %p34 = scmp.eq.s32.totalorder %s14, 0
    %p35 = por %p33, %p34
    %p36 = scmp.ne.s32.totalorder %s22, %s23
    %p37 = scmp.eq.s32.totalorder %s15, 1
    %p38 = por %p36, %p37
    %p40 = scmp.ne.s32.totalorder %s23, %s39
    %p41 = scmp.eq.s32.totalorder %s15, 0
    %p42 = por %p40, %p41
    %s44 = sadd.s32 %s43, 1
    %p47 = scmp.eq.s32.totalorder %s9, 1
    %p48 = scmp.ne.s32.totalorder %s43, %s45
    %p49 = scmp.eq.s32.totalorder %s9, 0
    %p50 = por %p48, %p49
    %p51 = scmp.ne.s32.totalorder %s43, %s45
    %p52 = scmp.eq.s32.totalorder %s14, 1
    %p53 = por %p51, %p52
    %p54 = scmp.ne.s32.totalorder %s45, %s46
    %p55 = scmp.eq.s32.totalorder %s14, 0
    %p56 = por %p54, %p55
    %p57 = scmp.ne.s32.totalorder %s45, %s46
    %p58 = scmp.eq.s32.totalorder %s15, 1
    %p59 = por %p57, %p58
    %p61 = scmp.ne.s32.totalorder %s46, %s60
    %p62 = scmp.eq.s32.totalorder %s15, 0
    %p63 = por %p61, %p62
    %s65 = sadd.s32 %s64, 1
    %p68 = scmp.eq.s32.totalorder %s9, 1
    %p69 = scmp.ne.s32.totalorder %s64, %s66
    %p70 = scmp.eq.s32.totalorder %s9, 0
    %p71 = por %p69, %p70
    %p72 = scmp.ne.s32.totalorder %s64, %s66
    %p73 = scmp.eq.s32.totalorder %s14, 1
    %p74 = por %p72, %p73
    %p75 = scmp.ne.s32.totalorder %s66, %s67
    %p76 = scmp.eq.s32.totalorder %s14, 0
    %p77 = por %p75, %p76
    %p78 = scmp.ne.s32.totalorder %s66, %s67
    %p79 = scmp.eq.s32.totalorder %s15, 1
    %p80 = por %p78, %p79
    %p82 = scmp.ne.s32.totalorder %s67, %s81
    %p83 = scmp.eq.s32.totalorder %s15, 0
    %p84 = por %p82, %p83
    %s85 = ssub.s32 %s9, %s16
    %p86 = scmp.eq.s32.totalorder %s85, 0
    %s88 = sadd.s32 %s87, 1
    %s89 = scalar_select %p86, %s87, %s88
    %p92 = pneg %p86
    %p93 = scmp.eq.s32.totalorder %s9, 1
    %p94 = por %p92, %p93
    %p95 = scmp.ne.s32.totalorder %s87, %s90
    %p96 = scmp.eq.s32.totalorder %s9, 0
    %p97 = por %p95, %p96
    %p98 = scmp.ne.s32.totalorder %s87, %s90
    %p99 = scmp.eq.s32.totalorder %s14, 1
    %p100 = por %p98, %p99
    %p101 = scmp.ne.s32.totalorder %s90, %s91
    %p102 = scmp.eq.s32.totalorder %s14, 0
    %p103 = por %p101, %p102
    %p104 = scmp.ne.s32.totalorder %s90, %s91
    %p105 = scmp.eq.s32.totalorder %s15, 1
    %p106 = por %p104, %p105
    %p108 = scmp.ne.s32.totalorder %s91, %s107
    %p109 = scmp.eq.s32.totalorder %s15, 0
    %p110 = por %p108, %p109
    %p111 = scmp.le.s32.totalorder 1, %s9
    %p112 = scmp.lt.s32.totalorder %s9, 3
    %p113 = pnand %p111, %p112
    %p114 = pneg %p113
    // Predicated region
    $region9: #{a_call__.5} parent=5 // pred_check
      _
    $region10: #{a_call__.5} parent=5 // pred_check_branch
      %116 = sbr.rel (%p113) target = $region12
    $region11: #{a_call__.5} parent=5 // pred_region
      %s117 = ssub.s32 %s9, 1
      // Predicated region
      $region13: #{a_call__.5} parent=11 // pred_check
        %p118 = pneg %p56
      $region14: #{a_call__.5} parent=11 // pred_check_branch
        %120 = sbr.rel (%p118) target = $region16
      $region15: #{a_call__.5} parent=11 // pred_region
        _
      $region16: #{a_call__.5} parent=11 // pred_fallthru
        _
      // Predicated region
      $region17: #{a_call__.5} parent=11 // pred_check
        %p121 = pneg %p77
      $region18: #{a_call__.5} parent=11 // pred_check_branch
        %123 = sbr.rel (%p121) target = $region20
      $region19: #{a_call__.5} parent=11 // pred_region
        _
      $region20: #{a_call__.5} parent=11 // pred_fallthru
        _
    $region12: #{a_call__.5} parent=5 // pred_fallthru
      _
    %p124 = scmp.lt.s32.totalorder %s9, 2
    // Predicated region
    $region21: #{a_call__.5} parent=5 // pred_check
      %p125 = pneg %p124
    $region22: #{a_call__.5} parent=5 // pred_check_branch
      %127 = sbr.rel (%p125) target = $region24
    $region23: #{a_call__.5} parent=5 // pred_region
      // Predicated region
      $region25: #{a_call__.5} parent=23 // pred_check
        %p128 = pneg %p29
      $region26: #{a_call__.5} parent=23 // pred_check_branch
        %130 = sbr.rel (%p128) target = $region28
      $region27: #{a_call__.5} parent=23 // pred_region
        %s131 = smul.u32 2, %s9
        %p132 = scmp.lt.s32.totalorder %s131, 3
        %s133 = scalar_select %p132, %s131, 3
        %s134 = smul.addr %s133, 2
        %s135 = smul.addr %s134, 4
        %s136 = scalar_lea.vmem %s0, %s135
        %s137 = smul.u32 2, %s9
      $region28: #{a_call__.5} parent=23 // pred_fallthru
        _
    $region24: #{a_call__.5} parent=5 // pred_fallthru
      _
    %p138 = scmp.le.s32.totalorder 1, %s9
    %p139 = scmp.lt.s32.totalorder %s9, 3
    %p140 = pnand %p138, %p139
    %p141 = pneg %p140
    // Predicated region
    $region29: #{a_call__.5} parent=5 // pred_check
      _
    $region30: #{a_call__.5} parent=5 // pred_check_branch
      %143 = sbr.rel (%p140) target = $region32
    $region31: #{a_call__.5} parent=5 // pred_region
      %s144 = ssub.s32 %s9, 1
      %s145 = smul.u32 2, %s14
      %p146 = scmp.lt.s32.totalorder %s145, 3
      %s147 = scalar_select %p146, %s145, 3
      %s148 = smul.addr %s147, 2
      %s149 = smul.addr %s148, 4
      %s150 = scalar_lea.vmem %s0, %s149
      %p151 = pneg %p35
      %p152 = pneg %p32
      %p153 = pneg %p56
      %p154 = pneg %p53
      %p155 = pneg %p77
      %p156 = pneg %p74
      %p157 = pneg %p103
      %p158 = pneg %p100
      %s159 = smul.u32 2, %s14
      %p160 = scmp.lt.s32.totalorder %s159, 3
      %s161 = scalar_select %p160, %s159, 3
      %s162 = smul.addr %s161, 4
      %s163 = scalar_lea.vmem %s3, %s162
      %s164 = smul.u32 2, %s14
      %p165 = scmp.lt.s32.totalorder %s164, 3
      %s166 = scalar_select %p165, %s164, 3
      %s167 = smul.addr %s166, 2
      %s168 = smul.addr %s167, 4
      %s169 = scalar_lea.vmem %s0, %s168
      %s170 = smul.u32 2, %s14
      %s171 = smul.u32 2, %s14
      %p172 = scmp.lt.s32.totalorder %s171, 3
      %s173 = scalar_select %p172, %s171, 3
      %s174 = smul.addr %s173, 4
      %s175 = scalar_lea.vmem %s3, %s174
      %s176 = smul.u32 2, %s14
      %v178 = vld [vmem:[%s169] sm:$0xff]
      %v179 = vld [vmem:[%s169 + $0x8] sm:$0xff]
      %v180 = vld [vmem:[%s1] sm:$0xf]
      %v181 = vld [vmem:[%s1 + $0x4] sm:$0xf]
      %v182 = vld [vmem:[%s1 + $0x8] sm:$0xf]
      %v183 = vld [vmem:[%s1 + $0xc] sm:$0xf]
      %v184 = vld [vmem:[%s1 + $0x10] sm:$0xf]
      %v185 = vld [vmem:[%s1 + $0x14] sm:$0xf]
      %v186 = vld [vmem:[%s1 + $0x18] sm:$0xf]
      %v187 = vld [vmem:[%s1 + $0x1c] sm:$0xf]
      %v188 = vld [vmem:[%s1 + $0x20] sm:$0xf]
      %v189 = vld [vmem:[%s1 + $0x24] sm:$0xf]
      %v190 = vld [vmem:[%s1 + $0x28] sm:$0xf]
      %v191 = vld [vmem:[%s1 + $0x2c] sm:$0xf]
      %v192 = vld [vmem:[%s1 + $0x30] sm:$0xf]
      %v193 = vld [vmem:[%s1 + $0x34] sm:$0xf]
      %v194 = vld [vmem:[%s1 + $0x38] sm:$0xf]
      %v195 = vld [vmem:[%s1 + $0x3c] sm:$0xf]
      %v196 = vld [vmem:[%s1 + $0x40] sm:$0xf]
      %v197 = vld [vmem:[%s1 + $0x44] sm:$0xf]
      %v198 = vld [vmem:[%s2] sm:$0x1]
      %v200 = vlaneseq
      %v201 = vshrl.u32 %v200, 7
      %v202 = vsub.s32 0, %v201
      %v203 = vrot.slane %v198, %v202
      %v207 = vunpack.c.l.b16 %v178
      %v208 = vunpack.c.h.b16 %v178
      %v209 = vunpack.c.l.b16 %v179
      %v210 = vunpack.c.h.b16 %v179
      %v211 = vpack.c.b16 %v209, %v207
      %v212 = vpack.c.b16 %v210, %v208
      %v232 = vunpack.c.l.b16 %v180
      %v233 = vunpack.c.l.b16 %v181
      %v234 = vunpack.c.l.b16 %v182
      %v235 = vunpack.c.l.b16 %v183
      %v236 = vunpack.c.l.b16 %v184
      %v237 = vunpack.c.l.b16 %v185
      %v238 = vunpack.c.l.b16 %v186
      %v239 = vunpack.c.l.b16 %v187
      %v240 = vunpack.c.l.b16 %v188
      %v241 = vunpack.c.l.b16 %v189
      %v242 = vunpack.c.l.b16 %v190
      %v243 = vunpack.c.l.b16 %v191
      %v244 = vunpack.c.l.b16 %v192
      %v245 = vunpack.c.l.b16 %v193
      %v246 = vunpack.c.l.b16 %v194
      %v247 = vunpack.c.l.b16 %v195
      %v248 = vunpack.c.l.b16 %v196
      %v249 = vunpack.c.l.b16 %v197
      %v250 = vpack.c.b16 %v233, %v232
      %v251 = vpack.c.b16 %v235, %v234
      %v252 = vpack.c.b16 %v237, %v236
      %v253 = vpack.c.b16 %v239, %v238
      %v254 = vpack.c.b16 %v241, %v240
      %v255 = vpack.c.b16 %v243, %v242
      %v256 = vpack.c.b16 %v245, %v244
      %v257 = vpack.c.b16 %v247, %v246
      %v258 = vpack.c.b16 %v249, %v248
      %vm268 = vcmask 130048
      %v270 = vsel %vm268, %v212, 0
      %272 = vmatprep.subr.bf16.mxu0 0
      %273 = vmatpush1.bf16.msra.mxu0 %v257
      %274 = vmatprep.subr.bf16.mxu0 0
      %275 = vmatpush1.bf16.msra.mxu0 %v256
      %276 = vmatprep.subr.bf16.mxu0 0
      %277 = vmatpush1.bf16.msra.mxu0 %v255
      %278 = vmatprep.subr.bf16.mxu0 0
      %279 = vmatpush1.bf16.msra.mxu0 %v254
      %280 = vmatprep.subr.bf16.mxu0 0
      %281 = vmatpush1.bf16.msra.mxu0 %v253
      %282 = vmatprep.subr.bf16.mxu0 0
      %283 = vmatpush1.bf16.msra.mxu0 %v252
      %284 = vmatprep.subr.bf16.mxu0 0
      %285 = vmatpush1.bf16.msra.mxu0 %v251
      %286 = vmatprep.subr.bf16.mxu0 0
      %287 = vmatpush1.bf16.msra.mxu0 %v250
      %288 = vmatprep.subr.bf16.mxu0 0
      %289 = vmatpush2.bf16.msra.mxu0 0
      %290 = vmatprep.subr.bf16.mxu0 0
      %291 = vmatpush2.bf16.msra.mxu0 0
      %292 = vmatprep.subr.bf16.mxu0 0
      %293 = vmatpush2.bf16.msra.mxu0 0
      %294 = vmatprep.subr.bf16.mxu0 0
      %295 = vmatpush2.bf16.msra.mxu0 0
      %296 = vmatprep.subr.bf16.mxu0 0
      %297 = vmatpush2.bf16.msra.mxu0 0
      %298 = vmatprep.subr.bf16.mxu0 0
      %299 = vmatpush2.bf16.msra.mxu0 0
      %300 = vmatprep.subr.bf16.mxu0 0
      %301 = vmatpush2.bf16.msra.mxu0 0
      %302 = vmatprep.subr.bf16.mxu0 0
      %303 = vmatpush2.bf16.msra.mxu0 %v258
      %304 = vmatprep.mubr.bf16.mxu0 %v270
      %305 = vmatmul.mubr.bf16.gmra.mxu0 %v211
      %v306 = vpop.f32.mrf.mxu0
      %v307 = vadd.f32 %v203, %v306
      %v308 = vpop.f32.mrf.mxu0
      %v309 = vpop.f32.mrf.mxu0
      %v310 = vadd.f32 %v203, %v309
      %v311 = vpop.f32.mrf.mxu0
      %312 = vdwg.mxu0
      %v313 = vmax.f32 %v307, 0.0
      %v314 = vmax.f32 %v310, 0.0
      %v315 = vpack.c.bf16 %v314, %v313
      %v317 = vunpack.c.l.b16 %v315
      %v318 = vunpack.c.h.b16 %v315
      %v319 = vpack.c.b16 %v317, %v317
      %v320 = vpack.c.b16 %v318, %v318
      %323 = vst [vmem:[%s175] sm:$0xf] %v319
      %324 = vst [vmem:[%s175 + $0x4] sm:$0xf] %v320
      %s325 = smul.u32 2, %s14
      %p326 = scmp.lt.s32.totalorder %s325, 3
      %s327 = scalar_select %p326, %s325, 3
      %s328 = smul.addr %s327, 4
      %s329 = scalar_lea.vmem %s3, %s328
      // Predicated region
      $region33: #{a_call__.5} parent=31 // pred_check
        %p330 = pneg %p100
      $region34: #{a_call__.5} parent=31 // pred_check_branch
        %332 = sbr.rel (%p330) target = $region36
      $region35: #{a_call__.5} parent=31 // pred_region
        %s333 = smul.u32 2, %s14
      $region36: #{a_call__.5} parent=31 // pred_fallthru
        _
    $region32: #{a_call__.5} parent=5 // pred_fallthru
      _
    %p334 = scmp.le.s32.totalorder 2, %s9
    // Predicated region
    $region37: #{a_call__.5} parent=5 // pred_check
      %p335 = pneg %p334
    $region38: #{a_call__.5} parent=5 // pred_check_branch
      %337 = sbr.rel (%p335) target = $region40
    $region39: #{a_call__.5} parent=5 // pred_region
      %s338 = ssub.s32 %s9, 2
      // Predicated region
      $region41: #{a_call__.5} parent=39 // pred_check
        %p339 = pneg %p106
      $region42: #{a_call__.5} parent=39 // pred_check_branch
        %341 = sbr.rel (%p339) target = $region44
      $region43: #{a_call__.5} parent=39 // pred_region
        %s342 = smul.u32 2, %s15
        %p343 = scmp.lt.s32.totalorder %s342, 3
        %s344 = scalar_select %p343, %s342, 3
        %s345 = smul.addr %s344, 4
        %s346 = scalar_lea.vmem %s3, %s345
      $region44: #{a_call__.5} parent=39 // pred_fallthru
        _
    $region40: #{a_call__.5} parent=5 // pred_fallthru
      _
  $region6: #{a_call__.5} parent=0 // loop_footer
    %s13 = sadd.s32 1, %s9
  $region7: #{a_call__.5} parent=0 // loop_footer_branch
    %8 = sbr.rel target = $region3
  $region8: #{a_call__.5} parent=0 // loop_exit
    _

// kernel: a_call__.6
$region0: #{a_call__.6}
  #allocation0 [shape = 'u32[]', space=smem, size = 0x4, offset = 0x4, fixed_abs, tag = 'smem constant byte address 0x4 - core index']
  #allocation1 [shape = 'u32[144,128]{1,0:T(1,128)}', space=vmem, size = 0x12000, scoped, tag = 'internal scratch']
  %s0 = inlined_call_operand.vmem [shape: bf16[16,288], index: 0, kind: input, shape index: {}]
  %s1 = inlined_call_operand.vmem [shape: bf16[288,128], index: 1, kind: input, shape index: {}]
  %s2 = inlined_call_operand.vmem [shape: f32[1,128], index: 2, kind: input, shape index: {}]
  %s3 = inlined_call_operand.vmem [shape: bf16[16,128], index: 3, kind: output, shape index: {}]
  %s4 = sld [smem:[#allocation0]]
  $region22: #{a_call__.6} parent=0
    _
  %s6 = ssub.s32 1, %s4
  %s7 = scalar_select 0, %s6, %s4
  // Predicated region
  $region2: #{a_call__.6} parent=0 // pred_check
    _
  $region3: #{a_call__.6} parent=0 // pred_check_branch
    %9 = sbr.rel (0) target = $region5
  $region4: #{a_call__.6} parent=0 // pred_region
    _
  $region5: #{a_call__.6} parent=0 // pred_fallthru
    _
  // Predicated region
  $region6: #{a_call__.6} parent=0 // pred_check
    _
  $region7: #{a_call__.6} parent=0 // pred_check_branch
    %11 = sbr.rel (0) target = $region9
  $region8: #{a_call__.6} parent=0 // pred_region
    _
  $region9: #{a_call__.6} parent=0 // pred_fallthru
    _
  // Predicated region
  $region10: #{a_call__.6} parent=0 // pred_check
    _
  $region11: #{a_call__.6} parent=0 // pred_check_branch
    %13 = sbr.rel (0) target = $region13
  $region12: #{a_call__.6} parent=0 // pred_region
    _
  $region13: #{a_call__.6} parent=0 // pred_fallthru
    _
  %v15 = vld [vmem:[%s0] sm:$0xff]
  %v16 = vld [vmem:[%s0 + $0x8] sm:$0xf]
  %v17 = vld [vmem:[%s0 + $0xc] sm:$0xff]
  %v18 = vld [vmem:[%s0 + $0x14] sm:$0xf]
  %v19 = vld [vmem:[%s1] sm:$0xf]
  %v20 = vld [vmem:[%s1 + $0x4] sm:$0xf]
  %v21 = vld [vmem:[%s1 + $0x8] sm:$0xf]
  %v22 = vld [vmem:[%s1 + $0xc] sm:$0xf]
  %v23 = vld [vmem:[%s1 + $0x10] sm:$0xf]
  %v24 = vld [vmem:[%s1 + $0x14] sm:$0xf]
  %v25 = vld [vmem:[%s1 + $0x18] sm:$0xf]
  %v26 = vld [vmem:[%s1 + $0x1c] sm:$0xf]
  %v27 = vld [vmem:[%s1 + $0x20] sm:$0xf]
  %v28 = vld [vmem:[%s1 + $0x24] sm:$0xf]
  %v29 = vld [vmem:[%s1 + $0x28] sm:$0xf]
  %v30 = vld [vmem:[%s1 + $0x2c] sm:$0xf]
  %v31 = vld [vmem:[%s1 + $0x30] sm:$0xf]
  %v32 = vld [vmem:[%s1 + $0x34] sm:$0xf]
  %v33 = vld [vmem:[%s1 + $0x38] sm:$0xf]
  %v34 = vld [vmem:[%s1 + $0x3c] sm:$0xf]
  %v35 = vld [vmem:[%s1 + $0x40] sm:$0xf]
  %v36 = vld [vmem:[%s1 + $0x44] sm:$0xf]
  %v37 = vld [vmem:[%s1 + $0x48] sm:$0xf]
  %v38 = vld [vmem:[%s1 + $0x4c] sm:$0xf]
  %v39 = vld [vmem:[%s1 + $0x50] sm:$0xf]
  %v40 = vld [vmem:[%s1 + $0x54] sm:$0xf]
  %v41 = vld [vmem:[%s1 + $0x58] sm:$0xf]
  %v42 = vld [vmem:[%s1 + $0x5c] sm:$0xf]
  %v43 = vld [vmem:[%s1 + $0x60] sm:$0xf]
  %v44 = vld [vmem:[%s1 + $0x64] sm:$0xf]
  %v45 = vld [vmem:[%s1 + $0x68] sm:$0xf]
  %v46 = vld [vmem:[%s1 + $0x6c] sm:$0xf]
  %v47 = vld [vmem:[%s1 + $0x70] sm:$0xf]
  %v48 = vld [vmem:[%s1 + $0x74] sm:$0xf]
  %v49 = vld [vmem:[%s1 + $0x78] sm:$0xf]
  %v50 = vld [vmem:[%s1 + $0x7c] sm:$0xf]
  %v51 = vld [vmem:[%s1 + $0x80] sm:$0xf]
  %v52 = vld [vmem:[%s1 + $0x84] sm:$0xf]
  %v53 = vld [vmem:[%s1 + $0x88] sm:$0xf]
  %v54 = vld [vmem:[%s1 + $0x8c] sm:$0xf]
  %v55 = vld [vmem:[%s2] sm:$0x1]
  %v57 = vlaneseq
  %v58 = vshrl.u32 %v57, 7
  %v59 = vsub.s32 0, %v58
  %v60 = vrot.slane %v55, %v59
  %v66 = vunpack.c.l.b16 %v15
  %v67 = vunpack.c.h.b16 %v15
  %v68 = vunpack.c.l.b16 %v16
  %v69 = vunpack.c.l.b16 %v17
  %v70 = vunpack.c.h.b16 %v17
  %v71 = vunpack.c.l.b16 %v18
  %v72 = vpack.c.b16 %v69, %v66
  %v73 = vpack.c.b16 %v70, %v67
  %v74 = vpack.c.b16 %v71, %v68
  %v113 = vunpack.c.l.b16 %v19
  %v114 = vunpack.c.l.b16 %v20
  %v115 = vunpack.c.l.b16 %v21
  %v116 = vunpack.c.l.b16 %v22
  %v117 = vunpack.c.l.b16 %v23
  %v118 = vunpack.c.l.b16 %v24
  %v119 = vunpack.c.l.b16 %v25
  %v120 = vunpack.c.l.b16 %v26
  %v121 = vunpack.c.l.b16 %v27
  %v122 = vunpack.c.l.b16 %v28
  %v123 = vunpack.c.l.b16 %v29
  %v124 = vunpack.c.l.b16 %v30
  %v125 = vunpack.c.l.b16 %v31
  %v126 = vunpack.c.l.b16 %v32
  %v127 = vunpack.c.l.b16 %v33
  %v128 = vunpack.c.l.b16 %v34
  %v129 = vunpack.c.l.b16 %v35
  %v130 = vunpack.c.l.b16 %v36
  %v131 = vunpack.c.l.b16 %v37
  %v132 = vunpack.c.l.b16 %v38
  %v133 = vunpack.c.l.b16 %v39
  %v134 = vunpack.c.l.b16 %v40
  %v135 = vunpack.c.l.b16 %v41
  %v136 = vunpack.c.l.b16 %v42
  %v137 = vunpack.c.l.b16 %v43
  %v138 = vunpack.c.l.b16 %v44
  %v139 = vunpack.c.l.b16 %v45
  %v140 = vunpack.c.l.b16 %v46
  %v141 = vunpack.c.l.b16 %v47
  %v142 = vunpack.c.l.b16 %v48
  %v143 = vunpack.c.l.b16 %v49
  %v144 = vunpack.c.l.b16 %v50
  %v145 = vunpack.c.l.b16 %v51
  %v146 = vunpack.c.l.b16 %v52
  %v147 = vunpack.c.l.b16 %v53
  %v148 = vunpack.c.l.b16 %v54
  %v149 = vpack.c.b16 %v114, %v113
  %v150 = vpack.c.b16 %v116, %v115
  %v151 = vpack.c.b16 %v118, %v117
  %v152 = vpack.c.b16 %v120, %v119
  %v153 = vpack.c.b16 %v122, %v121
  %v154 = vpack.c.b16 %v124, %v123
  %v155 = vpack.c.b16 %v126, %v125
  %v156 = vpack.c.b16 %v128, %v127
  %v157 = vpack.c.b16 %v130, %v129
  %v158 = vpack.c.b16 %v132, %v131
  %v159 = vpack.c.b16 %v134, %v133
  %v160 = vpack.c.b16 %v136, %v135
  %v161 = vpack.c.b16 %v138, %v137
  %v162 = vpack.c.b16 %v140, %v139
  %v163 = vpack.c.b16 %v142, %v141
  %v164 = vpack.c.b16 %v144, %v143
  %v165 = vpack.c.b16 %v146, %v145
  %v166 = vpack.c.b16 %v148, %v147
  %vm185 = vcmask 261120
  %v187 = vsel %vm185, %v74, 0
  %189 = vmatprep.subr.bf16.mxu0 0
  %190 = vmatpush1.bf16.msra.mxu0 %v156
  %191 = vmatprep.subr.bf16.mxu0 0
  %192 = vmatpush1.bf16.msra.mxu0 %v155
  %193 = vmatprep.subr.bf16.mxu0 0
  %194 = vmatpush1.bf16.msra.mxu0 %v154
  %195 = vmatprep.subr.bf16.mxu0 0
  %196 = vmatpush1.bf16.msra.mxu0 %v153
  %197 = vmatprep.subr.bf16.mxu0 0
  %198 = vmatpush1.bf16.msra.mxu0 %v152
  %199 = vmatprep.subr.bf16.mxu0 0
  %200 = vmatpush1.bf16.msra.mxu0 %v151
  %201 = vmatprep.subr.bf16.mxu0 0
  %202 = vmatpush1.bf16.msra.mxu0 %v150
  %203 = vmatprep.subr.bf16.mxu0 0
  %204 = vmatpush1.bf16.msra.mxu0 %v149
  %205 = vmatprep.subr.bf16.mxu0 0
  %206 = vmatpush2.bf16.msra.mxu0 %v164
  %207 = vmatprep.subr.bf16.mxu0 0
  %208 = vmatpush2.bf16.msra.mxu0 %v163
  %209 = vmatprep.subr.bf16.mxu0 0
  %210 = vmatpush2.bf16.msra.mxu0 %v162
  %211 = vmatprep.subr.bf16.mxu0 0
  %212 = vmatpush2.bf16.msra.mxu0 %v161
  %213 = vmatprep.subr.bf16.mxu0 0
  %214 = vmatpush2.bf16.msra.mxu0 %v160
  %215 = vmatprep.subr.bf16.mxu0 0
  %216 = vmatpush2.bf16.msra.mxu0 %v159
  %217 = vmatprep.subr.bf16.mxu0 0
  %218 = vmatpush2.bf16.msra.mxu0 %v158
  %219 = vmatprep.subr.bf16.mxu0 0
  %220 = vmatpush2.bf16.msra.mxu0 %v157
  %221 = vmatprep.mubr.bf16.mxu0 %v73
  %222 = vmatmul.mubr.bf16.gmra.mxu0 %v72
  %v223 = vpop.f32.mrf.mxu0
  %v224 = vadd.f32 %v60, %v223
  %v225 = vpop.f32.mrf.mxu0
  %v226 = vpop.f32.mrf.mxu0
  %v227 = vadd.f32 %v60, %v226
  %v228 = vpop.f32.mrf.mxu0
  %229 = vdwg.mxu0
  %230 = vmatprep.subr.bf16.mxu0 0
  %231 = vmatpush1.bf16.msra.mxu0 0
  %232 = vmatprep.subr.bf16.mxu0 0
  %233 = vmatpush1.bf16.msra.mxu0 0
  %234 = vmatprep.subr.bf16.mxu0 0
  %235 = vmatpush1.bf16.msra.mxu0 0
  %236 = vmatprep.subr.bf16.mxu0 0
  %237 = vmatpush1.bf16.msra.mxu0 0
  %238 = vmatprep.subr.bf16.mxu0 0
  %239 = vmatpush1.bf16.msra.mxu0 0
  %240 = vmatprep.subr.bf16.mxu0 0
  %241 = vmatpush1.bf16.msra.mxu0 0
  %242 = vmatprep.subr.bf16.mxu0 0
  %243 = vmatpush1.bf16.msra.mxu0 %v166
  %244 = vmatprep.subr.bf16.mxu0 0
  %245 = vmatpush1.bf16.msra.mxu0 %v165
  %246 = vmatprep.subr.bf16.mxu0 0
  %247 = vmatpush2.bf16.msra.mxu0 0
  %248 = vmatprep.subr.bf16.mxu0 0
  %249 = vmatpush2.bf16.msra.mxu0 0
  %250 = vmatprep.subr.bf16.mxu0 0
  %251 = vmatpush2.bf16.msra.mxu0 0
  %252 = vmatprep.subr.bf16.mxu0 0
  %253 = vmatpush2.bf16.msra.mxu0 0
  %254 = vmatprep.subr.bf16.mxu0 0
  %255 = vmatpush2.bf16.msra.mxu0 0
  %256 = vmatprep.subr.bf16.mxu0 0
  %257 = vmatpush2.bf16.msra.mxu0 0
  %258 = vmatprep.subr.bf16.mxu0 0
  %259 = vmatpush2.bf16.msra.mxu0 0
  %260 = vmatprep.subr.bf16.mxu0 0
  %261 = vmatpush2.bf16.msra.mxu0 0
  %262 = vmatprep.mubr.bf16.mxu0 0
  %263 = vmatmul.mubr.bf16.gmra.mxu0 %v187
  %v264 = vpop.f32.mrf.mxu0
  %v265 = vadd.f32 %v224, %v264
  %v266 = vpop.f32.mrf.mxu0
  %v267 = vpop.f32.mrf.mxu0
  %v268 = vadd.f32 %v227, %v267
  %v269 = vpop.f32.mrf.mxu0
  %270 = vdwg.mxu0
  %v271 = vmax.f32 %v265, 0.0
  %v272 = vmax.f32 %v268, 0.0
  %v273 = vpack.c.bf16 %v272, %v271
  %v275 = vunpack.c.l.b16 %v273
  %v276 = vunpack.c.h.b16 %v273
  %v277 = vpack.c.b16 %v275, %v275
  %v278 = vpack.c.b16 %v276, %v276
  %281 = vst [vmem:[%s3] sm:$0xf] %v277
  %282 = vst [vmem:[%s3 + $0x4] sm:$0xf] %v278
  // Predicated region
  $region14: #{a_call__.6} parent=0 // pred_check
    _
  $region15: #{a_call__.6} parent=0 // pred_check_branch
    %284 = sbr.rel (0) target = $region17
  $region16: #{a_call__.6} parent=0 // pred_region
    _
  $region17: #{a_call__.6} parent=0 // pred_fallthru
    _
  // Predicated region
  $region18: #{a_call__.6} parent=0 // pred_check
    _
  $region19: #{a_call__.6} parent=0 // pred_check_branch
    %286 = sbr.rel (0) target = $region21
  $region20: #{a_call__.6} parent=0 // pred_region
    _
  $region21: #{a_call__.6} parent=0 // pred_fallthru
    _

// kernel: a_call__.7
$region0: #{a_call__.7}
  #allocation0 [shape = 'u32[]', space=smem, size = 0x4, offset = 0x4, fixed_abs, tag = 'smem constant byte address 0x4 - core index']
  #allocation1 [shape = 'u32[144,128]{1,0:T(1,128)}', space=vmem, size = 0x12000, scoped, tag = 'internal scratch']
  %s0 = inlined_call_operand.vmem [shape: bf16[16,512], index: 0, kind: input, shape index: {}]
  %s1 = inlined_call_operand.vmem [shape: bf16[512,128], index: 1, kind: input, shape index: {}]
  %s2 = inlined_call_operand.vmem [shape: f32[1,128], index: 2, kind: input, shape index: {}, may-alias: {2,4}]
  %s3 = inlined_call_operand.vmem [shape: f32[128,128], index: 3, kind: input, shape index: {}]
  %s4 = inlined_call_operand.vmem [shape: f32[1,128], index: 4, kind: input, shape index: {}, may-alias: {2,4}]
  %s5 = inlined_call_operand.vmem [shape: f32[16,512], index: 5, kind: output, shape index: {}]
  %s6 = sld [smem:[#allocation0]]
  $region30: #{a_call__.7} parent=0
    _
  %s8 = ssub.s32 1, %s6
  %s9 = scalar_select 0, %s8, %s6
  // Predicated region
  $region2: #{a_call__.7} parent=0 // pred_check
    _
  $region3: #{a_call__.7} parent=0 // pred_check_branch
    %11 = sbr.rel (0) target = $region5
  $region4: #{a_call__.7} parent=0 // pred_region
    _
  $region5: #{a_call__.7} parent=0 // pred_fallthru
    _
  // Predicated region
  $region6: #{a_call__.7} parent=0 // pred_check
    _
  $region7: #{a_call__.7} parent=0 // pred_check_branch
    %13 = sbr.rel (0) target = $region9
  $region8: #{a_call__.7} parent=0 // pred_region
    _
  $region9: #{a_call__.7} parent=0 // pred_fallthru
    _
  // Predicated region
  $region10: #{a_call__.7} parent=0 // pred_check
    _
  $region11: #{a_call__.7} parent=0 // pred_check_branch
    %15 = sbr.rel (0) target = $region13
  $region12: #{a_call__.7} parent=0 // pred_region
    _
  $region13: #{a_call__.7} parent=0 // pred_fallthru
    _
  // Predicated region
  $region14: #{a_call__.7} parent=0 // pred_check
    _
  $region15: #{a_call__.7} parent=0 // pred_check_branch
    %17 = sbr.rel (0) target = $region17
  $region16: #{a_call__.7} parent=0 // pred_region
    _
  $region17: #{a_call__.7} parent=0 // pred_fallthru
    _
  // Predicated region
  $region18: #{a_call__.7} parent=0 // pred_check
    _
  $region19: #{a_call__.7} parent=0 // pred_check_branch
    %19 = sbr.rel (0) target = $region21
  $region20: #{a_call__.7} parent=0 // pred_region
    _
  $region21: #{a_call__.7} parent=0 // pred_fallthru
    _
  %v21 = vld [vmem:[%s2] sm:$0x1]
  %v22 = vld [vmem:[%s0] sm:$0xf]
  %v23 = vld [vmem:[%s0 + $0x10] sm:$0xf]
  %v24 = vld [vmem:[%s1] sm:$0xf]
  %v25 = vld [vmem:[%s1 + $0x4] sm:$0xf]
  %v26 = vld [vmem:[%s1 + $0x8] sm:$0xf]
  %v27 = vld [vmem:[%s1 + $0xc] sm:$0xf]
  %v28 = vld [vmem:[%s1 + $0x10] sm:$0xf]
  %v29 = vld [vmem:[%s1 + $0x14] sm:$0xf]
  %v30 = vld [vmem:[%s1 + $0x18] sm:$0xf]
  %v31 = vld [vmem:[%s1 + $0x1c] sm:$0xf]
  %v32 = vld [vmem:[%s1 + $0x20] sm:$0xf]
  %v33 = vld [vmem:[%s1 + $0x24] sm:$0xf]
  %v34 = vld [vmem:[%s1 + $0x28] sm:$0xf]
  %v35 = vld [vmem:[%s1 + $0x2c] sm:$0xf]
  %v36 = vld [vmem:[%s1 + $0x30] sm:$0xf]
  %v37 = vld [vmem:[%s1 + $0x34] sm:$0xf]
  %v38 = vld [vmem:[%s1 + $0x38] sm:$0xf]
  %v39 = vld [vmem:[%s1 + $0x3c] sm:$0xf]
  %v41 = vlaneseq
  %v42 = vshrl.u32 %v41, 7
  %v43 = vsub.s32 0, %v42
  %v44 = vrot.slane %v21, %v43
  %v48 = vunpack.c.l.b16 %v22
  %v49 = vunpack.c.l.b16 %v23
  %v50 = vpack.c.b16 %v49, %v48
  %v68 = vunpack.c.l.b16 %v24
  %v69 = vunpack.c.l.b16 %v25
  %v70 = vunpack.c.l.b16 %v26
  %v71 = vunpack.c.l.b16 %v27
  %v72 = vunpack.c.l.b16 %v28
  %v73 = vunpack.c.l.b16 %v29
  %v74 = vunpack.c.l.b16 %v30
  %v75 = vunpack.c.l.b16 %v31
  %v76 = vunpack.c.l.b16 %v32
  %v77 = vunpack.c.l.b16 %v33
  %v78 = vunpack.c.l.b16 %v34
  %v79 = vunpack.c.l.b16 %v35
  %v80 = vunpack.c.l.b16 %v36
  %v81 = vunpack.c.l.b16 %v37
  %v82 = vunpack.c.l.b16 %v38
  %v83 = vunpack.c.l.b16 %v39
  %v84 = vpack.c.b16 %v69, %v68
  %v85 = vpack.c.b16 %v71, %v70
  %v86 = vpack.c.b16 %v73, %v72
  %v87 = vpack.c.b16 %v75, %v74
  %v88 = vpack.c.b16 %v77, %v76
  %v89 = vpack.c.b16 %v79, %v78
  %v90 = vpack.c.b16 %v81, %v80
  %v91 = vpack.c.b16 %v83, %v82
  %100 = vmatprep.subr.bf16.mxu0 0
  %101 = vmatpush1.bf16.msra.mxu0 %v91
  %102 = vmatprep.subr.bf16.mxu0 0
  %103 = vmatpush1.bf16.msra.mxu0 %v90
  %104 = vmatprep.subr.bf16.mxu0 0
  %105 = vmatpush1.bf16.msra.mxu0 %v89
  %106 = vmatprep.subr.bf16.mxu0 0
  %107 = vmatpush1.bf16.msra.mxu0 %v88
  %108 = vmatprep.subr.bf16.mxu0 0
  %109 = vmatpush1.bf16.msra.mxu0 %v87
  %110 = vmatprep.subr.bf16.mxu0 0
  %111 = vmatpush1.bf16.msra.mxu0 %v86
  %112 = vmatprep.subr.bf16.mxu0 0
  %113 = vmatpush1.bf16.msra.mxu0 %v85
  %114 = vmatprep.subr.bf16.mxu0 0
  %115 = vmatpush1.bf16.msra.mxu0 %v84
  %116 = vmatprep.subr.bf16.mxu0 0
  %117 = vmatpush2.bf16.msra.mxu0 0
  %118 = vmatprep.subr.bf16.mxu0 0
  %119 = vmatpush2.bf16.msra.mxu0 0
  %120 = vmatprep.subr.bf16.mxu0 0
  %121 = vmatpush2.bf16.msra.mxu0 0
  %122 = vmatprep.subr.bf16.mxu0 0
  %123 = vmatpush2.bf16.msra.mxu0 0
  %124 = vmatprep.subr.bf16.mxu0 0
  %125 = vmatpush2.bf16.msra.mxu0 0
  %126 = vmatprep.subr.bf16.mxu0 0
  %127 = vmatpush2.bf16.msra.mxu0 0
  %128 = vmatprep.subr.bf16.mxu0 0
  %129 = vmatpush2.bf16.msra.mxu0 0
  %130 = vmatprep.subr.bf16.mxu0 0
  %131 = vmatpush2.bf16.msra.mxu0 0
  %132 = vmatprep.mubr.bf16.mxu0 0
  %133 = vmatmul.mubr.bf16.gmra.mxu0 %v50
  %v134 = vpop.f32.mrf.mxu0
  %v135 = vadd.f32 %v44, %v134
  %v136 = vpop.f32.mrf.mxu0
  %v137 = vpop.f32.mrf.mxu0
  %v138 = vadd.f32 %v44, %v137
  %v139 = vpop.f32.mrf.mxu0
  %140 = vdwg.mxu0
  %v141 = vmax.f32 %v135, 0.0
  %v142 = vmax.f32 %v138, 0.0
  %v143 = vld [vmem:[%s0 + $0x4] sm:$0xf]
  %v144 = vld [vmem:[%s0 + $0x14] sm:$0xf]
  %v145 = vld [vmem:[%s1 + $0x40] sm:$0xf]
  %v146 = vld [vmem:[%s1 + $0x44] sm:$0xf]
  %v147 = vld [vmem:[%s1 + $0x48] sm:$0xf]
  %v148 = vld [vmem:[%s1 + $0x4c] sm:$0xf]
  %v149 = vld [vmem:[%s1 + $0x50] sm:$0xf]
  %v150 = vld [vmem:[%s1 + $0x54] sm:$0xf]
  %v151 = vld [vmem:[%s1 + $0x58] sm:$0xf]
  %v152 = vld [vmem:[%s1 + $0x5c] sm:$0xf]
  %v153 = vld [vmem:[%s1 + $0x60] sm:$0xf]
  %v154 = vld [vmem:[%s1 + $0x64] sm:$0xf]
  %v155 = vld [vmem:[%s1 + $0x68] sm:$0xf]
  %v156 = vld [vmem:[%s1 + $0x6c] sm:$0xf]
  %v157 = vld [vmem:[%s1 + $0x70] sm:$0xf]
  %v158 = vld [vmem:[%s1 + $0x74] sm:$0xf]
  %v159 = vld [vmem:[%s1 + $0x78] sm:$0xf]
  %v160 = vld [vmem:[%s1 + $0x7c] sm:$0xf]
  %v163 = vunpack.c.l.b16 %v143
  %v164 = vunpack.c.l.b16 %v144
  %v165 = vpack.c.b16 %v164, %v163
  %v183 = vunpack.c.l.b16 %v145
  %v184 = vunpack.c.l.b16 %v146
  %v185 = vunpack.c.l.b16 %v147
  %v186 = vunpack.c.l.b16 %v148
  %v187 = vunpack.c.l.b16 %v149
  %v188 = vunpack.c.l.b16 %v150
  %v189 = vunpack.c.l.b16 %v151
  %v190 = vunpack.c.l.b16 %v152
  %v191 = vunpack.c.l.b16 %v153
  %v192 = vunpack.c.l.b16 %v154
  %v193 = vunpack.c.l.b16 %v155
  %v194 = vunpack.c.l.b16 %v156
  %v195 = vunpack.c.l.b16 %v157
  %v196 = vunpack.c.l.b16 %v158
  %v197 = vunpack.c.l.b16 %v159
  %v198 = vunpack.c.l.b16 %v160
  %v199 = vpack.c.b16 %v184, %v183
  %v200 = vpack.c.b16 %v186, %v185
  %v201 = vpack.c.b16 %v188, %v187
  %v202 = vpack.c.b16 %v190, %v189
  %v203 = vpack.c.b16 %v192, %v191
  %v204 = vpack.c.b16 %v194, %v193
  %v205 = vpack.c.b16 %v196, %v195
  %v206 = vpack.c.b16 %v198, %v197
  %215 = vmatprep.subr.bf16.mxu0 0
  %216 = vmatpush1.bf16.msra.mxu0 %v206
  %217 = vmatprep.subr.bf16.mxu0 0
  %218 = vmatpush1.bf16.msra.mxu0 %v205
  %219 = vmatprep.subr.bf16.mxu0 0
  %220 = vmatpush1.bf16.msra.mxu0 %v204
  %221 = vmatprep.subr.bf16.mxu0 0
  %222 = vmatpush1.bf16.msra.mxu0 %v203
  %223 = vmatprep.subr.bf16.mxu0 0
  %224 = vmatpush1.bf16.msra.mxu0 %v202
  %225 = vmatprep.subr.bf16.mxu0 0
  %226 = vmatpush1.bf16.msra.mxu0 %v201
  %227 = vmatprep.subr.bf16.mxu0 0
  %228 = vmatpush1.bf16.msra.mxu0 %v200
  %229 = vmatprep.subr.bf16.mxu0 0
  %230 = vmatpush1.bf16.msra.mxu0 %v199
  %231 = vmatprep.subr.bf16.mxu0 0
  %232 = vmatpush2.bf16.msra.mxu0 0
  %233 = vmatprep.subr.bf16.mxu0 0
  %234 = vmatpush2.bf16.msra.mxu0 0
  %235 = vmatprep.subr.bf16.mxu0 0
  %236 = vmatpush2.bf16.msra.mxu0 0
  %237 = vmatprep.subr.bf16.mxu0 0
  %238 = vmatpush2.bf16.msra.mxu0 0
  %239 = vmatprep.subr.bf16.mxu0 0
  %240 = vmatpush2.bf16.msra.mxu0 0
  %241 = vmatprep.subr.bf16.mxu0 0
  %242 = vmatpush2.bf16.msra.mxu0 0
  %243 = vmatprep.subr.bf16.mxu0 0
  %244 = vmatpush2.bf16.msra.mxu0 0
  %245 = vmatprep.subr.bf16.mxu0 0
  %246 = vmatpush2.bf16.msra.mxu0 0
  %247 = vmatprep.mubr.bf16.mxu0 0
  %248 = vmatmul.mubr.bf16.gmra.mxu0 %v165
  %v249 = vpop.f32.mrf.mxu0
  %v250 = vadd.f32 %v44, %v249
  %v251 = vpop.f32.mrf.mxu0
  %v252 = vpop.f32.mrf.mxu0
  %v253 = vadd.f32 %v44, %v252
  %v254 = vpop.f32.mrf.mxu0
  %255 = vdwg.mxu0
  %v256 = vmax.f32 %v250, 0.0
  %v257 = vmax.f32 %v253, 0.0
  %v258 = vld [vmem:[%s0 + $0x8] sm:$0xf]
  %v259 = vld [vmem:[%s0 + $0x18] sm:$0xf]
  %v260 = vld [vmem:[%s1 + $0x80] sm:$0xf]
  %v261 = vld [vmem:[%s1 + $0x84] sm:$0xf]
  %v262 = vld [vmem:[%s1 + $0x88] sm:$0xf]
  %v263 = vld [vmem:[%s1 + $0x8c] sm:$0xf]
  %v264 = vld [vmem:[%s1 + $0x90] sm:$0xf]
  %v265 = vld [vmem:[%s1 + $0x94] sm:$0xf]
  %v266 = vld [vmem:[%s1 + $0x98] sm:$0xf]
  %v267 = vld [vmem:[%s1 + $0x9c] sm:$0xf]
  %v268 = vld [vmem:[%s1 + $0xa0] sm:$0xf]
  %v269 = vld [vmem:[%s1 + $0xa4] sm:$0xf]
  %v270 = vld [vmem:[%s1 + $0xa8] sm:$0xf]
  %v271 = vld [vmem:[%s1 + $0xac] sm:$0xf]
  %v272 = vld [vmem:[%s1 + $0xb0] sm:$0xf]
  %v273 = vld [vmem:[%s1 + $0xb4] sm:$0xf]
  %v274 = vld [vmem:[%s1 + $0xb8] sm:$0xf]
  %v275 = vld [vmem:[%s1 + $0xbc] sm:$0xf]
  %v278 = vunpack.c.l.b16 %v258
  %v279 = vunpack.c.l.b16 %v259
  %v280 = vpack.c.b16 %v279, %v278
  %v298 = vunpack.c.l.b16 %v260
  %v299 = vunpack.c.l.b16 %v261
  %v300 = vunpack.c.l.b16 %v262
  %v301 = vunpack.c.l.b16 %v263
  %v302 = vunpack.c.l.b16 %v264
  %v303 = vunpack.c.l.b16 %v265
  %v304 = vunpack.c.l.b16 %v266
  %v305 = vunpack.c.l.b16 %v267
  %v306 = vunpack.c.l.b16 %v268
  %v307 = vunpack.c.l.b16 %v269
  %v308 = vunpack.c.l.b16 %v270
  %v309 = vunpack.c.l.b16 %v271
  %v310 = vunpack.c.l.b16 %v272
  %v311 = vunpack.c.l.b16 %v273
  %v312 = vunpack.c.l.b16 %v274
  %v313 = vunpack.c.l.b16 %v275
  %v314 = vpack.c.b16 %v299, %v298
  %v315 = vpack.c.b16 %v301, %v300
  %v316 = vpack.c.b16 %v303, %v302
  %v317 = vpack.c.b16 %v305, %v304
  %v318 = vpack.c.b16 %v307, %v306
  %v319 = vpack.c.b16 %v309, %v308
  %v320 = vpack.c.b16 %v311, %v310
  %v321 = vpack.c.b16 %v313, %v312
  %330 = vmatprep.subr.bf16.mxu0 0
  %331 = vmatpush1.bf16.msra.mxu0 %v321
  %332 = vmatprep.subr.bf16.mxu0 0
  %333 = vmatpush1.bf16.msra.mxu0 %v320
  %334 = vmatprep.subr.bf16.mxu0 0
  %335 = vmatpush1.bf16.msra.mxu0 %v319
  %336 = vmatprep.subr.bf16.mxu0 0
  %337 = vmatpush1.bf16.msra.mxu0 %v318
  %338 = vmatprep.subr.bf16.mxu0 0
  %339 = vmatpush1.bf16.msra.mxu0 %v317
  %340 = vmatprep.subr.bf16.mxu0 0
  %341 = vmatpush1.bf16.msra.mxu0 %v316
  %342 = vmatprep.subr.bf16.mxu0 0
  %343 = vmatpush1.bf16.msra.mxu0 %v315
  %344 = vmatprep.subr.bf16.mxu0 0
  %345 = vmatpush1.bf16.msra.mxu0 %v314
  %346 = vmatprep.subr.bf16.mxu0 0
  %347 = vmatpush2.bf16.msra.mxu0 0
  %348 = vmatprep.subr.bf16.mxu0 0
  %349 = vmatpush2.bf16.msra.mxu0 0
  %350 = vmatprep.subr.bf16.mxu0 0
  %351 = vmatpush2.bf16.msra.mxu0 0
  %352 = vmatprep.subr.bf16.mxu0 0
  %353 = vmatpush2.bf16.msra.mxu0 0
  %354 = vmatprep.subr.bf16.mxu0 0
  %355 = vmatpush2.bf16.msra.mxu0 0
  %356 = vmatprep.subr.bf16.mxu0 0
  %357 = vmatpush2.bf16.msra.mxu0 0
  %358 = vmatprep.subr.bf16.mxu0 0
  %359 = vmatpush2.bf16.msra.mxu0 0
  %360 = vmatprep.subr.bf16.mxu0 0
  %361 = vmatpush2.bf16.msra.mxu0 0
  %362 = vmatprep.mubr.bf16.mxu0 0
  %363 = vmatmul.mubr.bf16.gmra.mxu0 %v280
  %v364 = vpop.f32.mrf.mxu0
  %v365 = vadd.f32 %v44, %v364
  %v366 = vpop.f32.mrf.mxu0
  %v367 = vpop.f32.mrf.mxu0
  %v368 = vadd.f32 %v44, %v367
  %v369 = vpop.f32.mrf.mxu0
  %370 = vdwg.mxu0
  %v371 = vmax.f32 %v365, 0.0
  %v372 = vmax.f32 %v368, 0.0
  %v373 = vld [vmem:[%s0 + $0xc] sm:$0xf]
  %v374 = vld [vmem:[%s0 + $0x1c] sm:$0xf]
  %v375 = vld [vmem:[%s1 + $0xc0] sm:$0xf]
  %v376 = vld [vmem:[%s1 + $0xc4] sm:$0xf]
  %v377 = vld [vmem:[%s1 + $0xc8] sm:$0xf]
  %v378 = vld [vmem:[%s1 + $0xcc] sm:$0xf]
  %v379 = vld [vmem:[%s1 + $0xd0] sm:$0xf]
  %v380 = vld [vmem:[%s1 + $0xd4] sm:$0xf]
  %v381 = vld [vmem:[%s1 + $0xd8] sm:$0xf]
  %v382 = vld [vmem:[%s1 + $0xdc] sm:$0xf]
  %v383 = vld [vmem:[%s1 + $0xe0] sm:$0xf]
  %v384 = vld [vmem:[%s1 + $0xe4] sm:$0xf]
  %v385 = vld [vmem:[%s1 + $0xe8] sm:$0xf]
  %v386 = vld [vmem:[%s1 + $0xec] sm:$0xf]
  %v387 = vld [vmem:[%s1 + $0xf0] sm:$0xf]
  %v388 = vld [vmem:[%s1 + $0xf4] sm:$0xf]
  %v389 = vld [vmem:[%s1 + $0xf8] sm:$0xf]
  %v390 = vld [vmem:[%s1 + $0xfc] sm:$0xf]
  %v393 = vunpack.c.l.b16 %v373
  %v394 = vunpack.c.l.b16 %v374
  %v395 = vpack.c.b16 %v394, %v393
  %v413 = vunpack.c.l.b16 %v375
  %v414 = vunpack.c.l.b16 %v376
  %v415 = vunpack.c.l.b16 %v377
  %v416 = vunpack.c.l.b16 %v378
  %v417 = vunpack.c.l.b16 %v379
  %v418 = vunpack.c.l.b16 %v380
  %v419 = vunpack.c.l.b16 %v381
  %v420 = vunpack.c.l.b16 %v382
  %v421 = vunpack.c.l.b16 %v383
  %v422 = vunpack.c.l.b16 %v384
  %v423 = vunpack.c.l.b16 %v385
  %v424 = vunpack.c.l.b16 %v386
  %v425 = vunpack.c.l.b16 %v387
  %v426 = vunpack.c.l.b16 %v388
  %v427 = vunpack.c.l.b16 %v389
  %v428 = vunpack.c.l.b16 %v390
  %v429 = vpack.c.b16 %v414, %v413
  %v430 = vpack.c.b16 %v416, %v415
  %v431 = vpack.c.b16 %v418, %v417
  %v432 = vpack.c.b16 %v420, %v419
  %v433 = vpack.c.b16 %v422, %v421
  %v434 = vpack.c.b16 %v424, %v423
  %v435 = vpack.c.b16 %v426, %v425
  %v436 = vpack.c.b16 %v428, %v427
  %445 = vmatprep.subr.bf16.mxu0 0
  %446 = vmatpush1.bf16.msra.mxu0 %v436
  %447 = vmatprep.subr.bf16.mxu0 0
  %448 = vmatpush1.bf16.msra.mxu0 %v435
  %449 = vmatprep.subr.bf16.mxu0 0
  %450 = vmatpush1.bf16.msra.mxu0 %v434
  %451 = vmatprep.subr.bf16.mxu0 0
  %452 = vmatpush1.bf16.msra.mxu0 %v433
  %453 = vmatprep.subr.bf16.mxu0 0
  %454 = vmatpush1.bf16.msra.mxu0 %v432
  %455 = vmatprep.subr.bf16.mxu0 0
  %456 = vmatpush1.bf16.msra.mxu0 %v431
  %457 = vmatprep.subr.bf16.mxu0 0
  %458 = vmatpush1.bf16.msra.mxu0 %v430
  %459 = vmatprep.subr.bf16.mxu0 0
  %460 = vmatpush1.bf16.msra.mxu0 %v429
  %461 = vmatprep.subr.bf16.mxu0 0
  %462 = vmatpush2.bf16.msra.mxu0 0
  %463 = vmatprep.subr.bf16.mxu0 0
  %464 = vmatpush2.bf16.msra.mxu0 0
  %465 = vmatprep.subr.bf16.mxu0 0
  %466 = vmatpush2.bf16.msra.mxu0 0
  %467 = vmatprep.subr.bf16.mxu0 0
  %468 = vmatpush2.bf16.msra.mxu0 0
  %469 = vmatprep.subr.bf16.mxu0 0
  %470 = vmatpush2.bf16.msra.mxu0 0
  %471 = vmatprep.subr.bf16.mxu0 0
  %472 = vmatpush2.bf16.msra.mxu0 0
  %473 = vmatprep.subr.bf16.mxu0 0
  %474 = vmatpush2.bf16.msra.mxu0 0
  %475 = vmatprep.subr.bf16.mxu0 0
  %476 = vmatpush2.bf16.msra.mxu0 0
  %477 = vmatprep.mubr.bf16.mxu0 0
  %478 = vmatmul.mubr.bf16.gmra.mxu0 %v395
  %v479 = vpop.f32.mrf.mxu0
  %v480 = vadd.f32 %v44, %v479
  %v481 = vpop.f32.mrf.mxu0
  %v482 = vpop.f32.mrf.mxu0
  %v483 = vadd.f32 %v44, %v482
  %v484 = vpop.f32.mrf.mxu0
  %485 = vdwg.mxu0
  %v486 = vmax.f32 %v480, 0.0
  %v487 = vmax.f32 %v483, 0.0
  %v488 = vld [vmem:[%s3] sm:$0xff]
  %v489 = vld [vmem:[%s3 + $0x8] sm:$0xff]
  %v490 = vld [vmem:[%s3 + $0x10] sm:$0xff]
  %v491 = vld [vmem:[%s3 + $0x18] sm:$0xff]
  %v492 = vld [vmem:[%s3 + $0x20] sm:$0xff]
  %v493 = vld [vmem:[%s3 + $0x28] sm:$0xff]
  %v494 = vld [vmem:[%s3 + $0x30] sm:$0xff]
  %v495 = vld [vmem:[%s3 + $0x38] sm:$0xff]
  %v496 = vld [vmem:[%s3 + $0x40] sm:$0xff]
  %v497 = vld [vmem:[%s3 + $0x48] sm:$0xff]
  %v498 = vld [vmem:[%s3 + $0x50] sm:$0xff]
  %v499 = vld [vmem:[%s3 + $0x58] sm:$0xff]
  %v500 = vld [vmem:[%s3 + $0x60] sm:$0xff]
  %v501 = vld [vmem:[%s3 + $0x68] sm:$0xff]
  %v502 = vld [vmem:[%s3 + $0x70] sm:$0xff]
  %v503 = vld [vmem:[%s3 + $0x78] sm:$0xff]
  %v504 = vld [vmem:[%s4] sm:$0x1]
  %v506 = vlaneseq
  %v507 = vshrl.u32 %v506, 7
  %v508 = vsub.s32 0, %v507
  %v509 = vrot.slane %v504, %v508
  %511 = vmatprep.subr.mxu0 0.0
  %512 = vmatpush1.msra.mxu0 %v503
  %513 = vmatprep.subr.mxu0 0.0
  %514 = vmatpush1.msra.mxu0 %v502
  %515 = vmatprep.subr.mxu0 0.0
  %516 = vmatpush1.msra.mxu0 %v501
  %517 = vmatprep.subr.mxu0 0.0
  %518 = vmatpush1.msra.mxu0 %v500
  %519 = vmatprep.subr.mxu0 0.0
  %520 = vmatpush1.msra.mxu0 %v499
  %521 = vmatprep.subr.mxu0 0.0
  %522 = vmatpush1.msra.mxu0 %v498
  %523 = vmatprep.subr.mxu0 0.0
  %524 = vmatpush1.msra.mxu0 %v497
  %525 = vmatprep.subr.mxu0 0.0
  %526 = vmatpush1.msra.mxu0 %v496
  %527 = vmatprep.subr.mxu0 0.0
  %528 = vmatpush1.msra.mxu0 %v495
  %529 = vmatprep.subr.mxu0 0.0
  %530 = vmatpush1.msra.mxu0 %v494
  %531 = vmatprep.subr.mxu0 0.0
  %532 = vmatpush1.msra.mxu0 %v493
  %533 = vmatprep.subr.mxu0 0.0
  %534 = vmatpush1.msra.mxu0 %v492
  %535 = vmatprep.subr.mxu0 0.0
  %536 = vmatpush1.msra.mxu0 %v491
  %537 = vmatprep.subr.mxu0 0.0
  %538 = vmatpush1.msra.mxu0 %v490
  %539 = vmatprep.subr.mxu0 0.0
  %540 = vmatpush1.msra.mxu0 %v489
  %541 = vmatprep.subr.mxu0 0.0
  %542 = vmatpush1.msra.mxu0 %v488
  %543 = vmatprep.subr.mxu0 0.0
  %544 = vmatpush2.msra.mxu0 0.0
  %545 = vmatprep.subr.mxu0 0.0
  %546 = vmatpush2.msra.mxu0 0.0
  %547 = vmatprep.subr.mxu0 0.0
  %548 = vmatpush2.msra.mxu0 0.0
  %549 = vmatprep.subr.mxu0 0.0
  %550 = vmatpush2.msra.mxu0 0.0
  %551 = vmatprep.subr.mxu0 0.0
  %552 = vmatpush2.msra.mxu0 0.0
  %553 = vmatprep.subr.mxu0 0.0
  %554 = vmatpush2.msra.mxu0 0.0
  %555 = vmatprep.subr.mxu0 0.0
  %556 = vmatpush2.msra.mxu0 0.0
  %557 = vmatprep.subr.mxu0 0.0
  %558 = vmatpush2.msra.mxu0 0.0
  %559 = vmatprep.subr.mxu0 0.0
  %560 = vmatpush2.msra.mxu0 0.0
  %561 = vmatprep.subr.mxu0 0.0
  %562 = vmatpush2.msra.mxu0 0.0
  %563 = vmatprep.subr.mxu0 0.0
  %564 = vmatpush2.msra.mxu0 0.0
  %565 = vmatprep.subr.mxu0 0.0
  %566 = vmatpush2.msra.mxu0 0.0
  %567 = vmatprep.subr.mxu0 0.0
  %568 = vmatpush2.msra.mxu0 0.0
  %569 = vmatprep.subr.mxu0 0.0
  %570 = vmatpush2.msra.mxu0 0.0
  %571 = vmatprep.subr.mxu0 0.0
  %572 = vmatpush2.msra.mxu0 0.0
  %573 = vmatprep.subr.mxu0 0.0
  %574 = vmatpush2.msra.mxu0 0.0
  %575 = vmatprep.mubr.f32.mxu0 0.0
  %576 = vmatmul.mubr.f32.gmra.mxu0 %v141
  %v577 = vpop.f32.mrf.mxu0
  %v578 = vadd.f32 %v509, %v577
  %v579 = vpop.f32.mrf.mxu0
  %580 = vmatprep.mubr.f32.mxu0 0.0
  %581 = vmatmul.mubr.f32.gmra.mxu0 %v142
  %v582 = vpop.f32.mrf.mxu0
  %v583 = vadd.f32 %v509, %v582
  %v584 = vpop.f32.mrf.mxu0
  %585 = vmatprep.mubr.f32.mxu0 0.0
  %586 = vmatmul.mubr.f32.gmra.mxu0 %v256
  %v587 = vpop.f32.mrf.mxu0
  %v588 = vadd.f32 %v509, %v587
  %v589 = vpop.f32.mrf.mxu0
  %590 = vmatprep.mubr.f32.mxu0 0.0
  %591 = vmatmul.mubr.f32.gmra.mxu0 %v257
  %v592 = vpop.f32.mrf.mxu0
  %v593 = vadd.f32 %v509, %v592
  %v594 = vpop.f32.mrf.mxu0
  %595 = vmatprep.mubr.f32.mxu0 0.0
  %596 = vmatmul.mubr.f32.gmra.mxu0 %v371
  %v597 = vpop.f32.mrf.mxu0
  %v598 = vadd.f32 %v509, %v597
  %v599 = vpop.f32.mrf.mxu0
  %600 = vmatprep.mubr.f32.mxu0 0.0
  %601 = vmatmul.mubr.f32.gmra.mxu0 %v372
  %v602 = vpop.f32.mrf.mxu0
  %v603 = vadd.f32 %v509, %v602
  %v604 = vpop.f32.mrf.mxu0
  %605 = vmatprep.mubr.f32.mxu0 0.0
  %606 = vmatmul.mubr.f32.gmra.mxu0 %v486
  %v607 = vpop.f32.mrf.mxu0
  %v608 = vadd.f32 %v509, %v607
  %v609 = vpop.f32.mrf.mxu0
  %610 = vmatprep.mubr.f32.mxu0 0.0
  %611 = vmatmul.mubr.f32.gmra.mxu0 %v487
  %v612 = vpop.f32.mrf.mxu0
  %v613 = vadd.f32 %v509, %v612
  %v614 = vpop.f32.mrf.mxu0
  %615 = vdwg.mxu0
  %616 = vst [vmem:[%s5] sm:$0xff] %v578
  %617 = vst [vmem:[%s5 + $0x20] sm:$0xff] %v583
  %618 = vst [vmem:[%s5 + $0x8] sm:$0xff] %v588
  %619 = vst [vmem:[%s5 + $0x28] sm:$0xff] %v593
  %620 = vst [vmem:[%s5 + $0x10] sm:$0xff] %v598
  %621 = vst [vmem:[%s5 + $0x30] sm:$0xff] %v603
  %622 = vst [vmem:[%s5 + $0x18] sm:$0xff] %v608
  %623 = vst [vmem:[%s5 + $0x38] sm:$0xff] %v613
  // Predicated region
  $region22: #{a_call__.7} parent=0 // pred_check
    _
  $region23: #{a_call__.7} parent=0 // pred_check_branch
    %625 = sbr.rel (0) target = $region25
  $region24: #{a_call__.7} parent=0 // pred_region
    _
  $region25: #{a_call__.7} parent=0 // pred_fallthru
    _
  // Predicated region
  $region26: #{a_call__.7} parent=0 // pred_check
    _
  $region27: #{a_call__.7} parent=0 // pred_check_branch
    %627 = sbr.rel (0) target = $region29
  $region28: #{a_call__.7} parent=0 // pred_region
    _
  $region29: #{a_call__.7} parent=0 // pred_fallthru
    _

</llo_original>
